<compile_context>
chip_gen: v7x
topology: tpu7x:2x2x1
jax: 0.10.0
libtpu: 0.0.40
codegen_flags: <defaults>
</compile_context>

<pallas_src>
import math
from functools import partial

import jax
import jax.numpy as jnp
from jax.experimental import pallas as pl
from jax.experimental.pallas import tpu as pltpu


def gaussian_basis_trf_kernel(scale_ref, coef_ref, mu_ref, t_ref,
                              a_ref, b_ref, c_ref, o_ref, x_scr,
                              *, n_basis, in_dim,
                              include_constant_term, sum_in_dim):
    # One grid point = one (batch n, seq tile s, output channel o) triple.
    o = pl.program_id(2)

    # x[i, l, s] = c[i, s] * (t[l] - b[i, s])  -> (inDim, nLag, seqTile)
    # Only recomputed when the (batch, seq-tile) block changes: outDim is the
    # innermost, "arbitrary" grid axis, so o == 0 marks a fresh (n, s) block.
    @pl.when(o == 0)
    def _():
        t_col = t_ref[...]                                   # (nLag, 1)
        b_v = b_ref[0]                                       # (inDim, seqTile)
        c_v = c_ref[0]                                       # (inDim, seqTile)
        x_scr[...] = c_v[:, None, :] * (t_col[None, :, :] - b_v[:, None, :])

    # Flat SMEM bases for this output channel (scalar math, free slots).
    sbase = o * (n_basis * in_dim)            # scale table:  (outDim, nBasis,   inDim)
    cbase = o * ((n_basis + 1) * in_dim)      # coef  table:  (outDim, nBasis+1, inDim)

    if sum_in_dim:
        total = jnp.zeros((o_ref.shape[-2], o_ref.shape[-1]), dtype=jnp.float32)

    for i in range(in_dim):                                  # static, small
        x_i = x_scr[i]                                       # (nLag, seqTile)
        if include_constant_term:
            acc = jnp.full(x_i.shape,
                           coef_ref[cbase + n_basis * in_dim + i],
                           dtype=jnp.float32)
        else:
            acc = jnp.zeros(x_i.shape, dtype=jnp.float32)
        for k in range(n_basis):                             # static, small
            d = x_i - mu_ref[k]
            acc = acc + coef_ref[cbase + k * in_dim + i] * jnp.exp(
                d * d * scale_ref[sbase + k * in_dim + i])
        aw = a_ref[0, i] * acc                               # (seqTile,) bcast over lags
        if sum_in_dim:
            total = total + aw                               # fused torch .sum(-3)
        else:
            o_ref[0, 0, i] = aw

    if sum_in_dim:
        o_ref[0, 0] = total


def _round_up(x, m):
    return ((x + m - 1) // m) * m


def _choose_seq_tile(n_seq, in_dim, n_lag, sum_in_dim,
                     max_tile=512, vmem_budget_bytes=12 * 1024 * 1024):
    """Largest lane-dense (multiple of 128) seq tile whose per-step VMEM stays
    well under the default scoped limits (16 MiB on v5e, 32 MiB on v6e/v7x)."""
    lane = 128
    tile = min(max_tile, _round_up(n_seq, lane))
    tile = max(lane, (tile // lane) * lane)
    out_rows = n_lag if sum_in_dim else in_dim * n_lag

    def est(t):
        # 2x double-buffered a/b/c inputs + 2x double-buffered output tile
        # + x scratch + ~4 live (nLag, t) f32 temporaries
        return 4 * t * (2 * 3 * in_dim + 2 * out_rows + in_dim * n_lag + 4 * n_lag)

    while tile > lane and est(tile) > vmem_budget_bytes:
        tile -= lane
    return tile


def gaussian_basis_trf_forward(a, b, c, t, mu, sigma, coefs, *,
                               sigma_min, sigma_max,
                               include_constant_term=True,
                               if_sum_in_dim=False,
                               seq_tile=None):
    """Pallas implementation of GaussianBasisTRF.forward(a, b, c).

    a, b, c: (nBatch, inDim, nSeq) float32 (squeezed torch broadcast operands).
    Returns (nBatch, outDim, inDim, nLag, nSeq), or (nBatch, outDim, nLag, nSeq)
    when if_sum_in_dim=True (inDim reduction fused in-kernel).
    """
    n_batch, in_dim, n_seq = a.shape
    n_basis, out_dim, in_dim2 = sigma.shape
    assert in_dim2 == in_dim and coefs.shape == (n_basis + 1, out_dim, in_dim)
    n_lag = t.shape[0]
    f32 = jnp.float32

    if seq_tile is None:
        seq_tile = _choose_seq_tile(n_seq, in_dim, n_lag, if_sum_in_dim)
    seq_tile = max(128, (int(seq_tile) // 128) * 128)
    n_seq_pad = _round_up(n_seq, seq_tile)
    n_seq_tiles = n_seq_pad // seq_tile

    def _pad_seq(v):
        v = v.astype(f32)
        if n_seq_pad != n_seq:
            v = jnp.pad(v, ((0, 0), (0, 0), (0, n_seq_pad - n_seq)))
        return v

    a_p, b_p, c_p = _pad_seq(a), _pad_seq(b), _pad_seq(c)

    t2 = t.reshape(n_lag, 1).astype(f32)
    mu1 = mu.reshape(n_basis).astype(f32)                    # SMEM scalars

    # sigma clamp (max then min, exactly as in torch) folded into the exp scale
    # once on a tiny (nBasis, outDim, inDim) array; removes the in-kernel divide
    # and the clamp from the hot path.
    sig_c = jnp.minimum(jnp.maximum(sigma.astype(f32), f32(sigma_min)), f32(sigma_max))
    scale = -1.0 / (2.0 * sig_c * sig_c)                     # (nBasis, outDim, inDim)
    # outDim-major 1-D SMEM tables (1-D avoids SMEM (8,128) padding blowup).
    scale_flat = jnp.transpose(scale, (1, 0, 2)).reshape(-1)
    coefs_flat = jnp.transpose(coefs.astype(f32), (1, 0, 2)).reshape(-1)

    kernel = partial(gaussian_basis_trf_kernel,
                     n_basis=n_basis,
                     in_dim=in_dim,
                     include_constant_term=bool(include_constant_term),
                     sum_in_dim=bool(if_sum_in_dim))

    if if_sum_in_dim:
        out_shape = jax.ShapeDtypeStruct((n_batch, out_dim, n_lag, n_seq_pad), f32)
        out_spec = pl.BlockSpec((1, 1, n_lag, seq_tile),
                                lambda n, s, o: (n, o, 0, s))
        out_rows = n_lag
    else:
        out_shape = jax.ShapeDtypeStruct((n_batch, out_dim, in_dim, n_lag, n_seq_pad), f32)
        out_spec = pl.BlockSpec((1, 1, in_dim, n_lag, seq_tile),
                                lambda n, s, o: (n, o, 0, 0, s))
        out_rows = in_dim * n_lag

    # Advisory cost: dominated by nBasis exps per output element + HBM writeback.
    n_elems = n_batch * out_dim * in_dim * n_lag * n_seq_pad
    cost = pl.CostEstimate(
        flops=n_elems * (5 * n_basis + 4),
        transcendentals=n_elems * n_basis,
        bytes_accessed=4 * (n_batch * out_dim * out_rows * n_seq_pad
                            + 3 * n_batch * in_dim * n_seq_pad
                            + int(sigma.size) + int(coefs.size) + int(mu.size) + n_lag),
    )

    out = pl.pallas_call(
        kernel,
        out_shape=out_shape,
        # outDim innermost & "arbitrary": a/b/c blocks and the x scratch stay
        # VMEM-resident across all outDim iterations; only the output tile
        # changes per o, and the per-o parameters are SMEM scalar reads.
        grid=(n_batch, n_seq_tiles, out_dim),
        in_specs=[
            pl.BlockSpec(memory_space=pltpu.MemorySpace.SMEM),                  # scale table
            pl.BlockSpec(memory_space=pltpu.MemorySpace.SMEM),                  # coef table
            pl.BlockSpec(memory_space=pltpu.MemorySpace.SMEM),                  # mu
            pl.BlockSpec((n_lag, 1), lambda n, s, o: (0, 0)),                   # t
            pl.BlockSpec((1, in_dim, seq_tile), lambda n, s, o: (n, 0, s)),     # a
            pl.BlockSpec((1, in_dim, seq_tile), lambda n, s, o: (n, 0, s)),     # b
            pl.BlockSpec((1, in_dim, seq_tile), lambda n, s, o: (n, 0, s)),     # c
        ],
        out_specs=out_spec,
        scratch_shapes=[pltpu.VMEM((in_dim, n_lag, seq_tile), f32)],            # cached x
        compiler_params=pltpu.CompilerParams(
            dimension_semantics=("parallel", "parallel", "arbitrary")),
        cost_estimate=cost,
    )(scale_flat, coefs_flat, mu1, t2, a_p, b_p, c_p)

    if n_seq_pad != n_seq:
        out = out[..., :n_seq]
    return out


def reference_forward(a5, b5, c5, t, mu, sigma, coefs,
                      sigma_min, sigma_max, include_constant_term, if_sum_in_dim):
    """Pure-JAX replica of the exact torch broadcasting semantics (for checking)."""
    te = t.reshape(1, 1, 1, -1, 1)                    # time_embedding
    x = c5 * (te - b5)                                # ndim 5
    x = x[:, None, ...]                               # build_gaussian_response expand
    sig = jnp.minimum(jnp.maximum(sigma, sigma_min), sigma_max)
    mu_b = mu[..., None, None, None, None]
    sig_b = sig[..., None, None]
    gauss = jnp.exp(-(x - mu_b) ** 2 / (2 * sig_b ** 2))
    co = coefs[..., None, None]
    w = (co[:-1] * gauss).sum(-5)
    if include_constant_term:
        w = w + co[-1]
    w = a5 * w
    if if_sum_in_dim:
        w = w.sum(-3)
    return w


if __name__ == "__main__":
    key = jax.random.PRNGKey(0)
    n_batch, in_dim, out_dim, n_seq = 2, 3, 4, 8
    tmin_idx, tmax_idx, timeshift_limit_idx = 0, 15, 2
    n_basis = 5
    sigma_min, sigma_max = 3.0, 8.0     # distinct, so the clamp is exercised

    # FuncBasisTRF.__init__ time embeddings
    t = jnp.arange(tmin_idx, tmax_idx + 1, dtype=jnp.float32)                    # (nLag,)
    t_ext = jnp.arange(tmin_idx - timeshift_limit_idx,
                       tmax_idx + timeshift_limit_idx + 1, dtype=jnp.float32)

    # deterministic parameter init (mimics kaiming_uniform_(a=sqrt(5)) bounds)
    k1, k2, k3, k4, k5 = jax.random.split(key, 5)
    bound = 1.0 / math.sqrt(out_dim * in_dim)
    coefs = jax.random.uniform(k1, (n_basis + 1, out_dim, in_dim),
                               minval=-bound, maxval=bound, dtype=jnp.float32)
    # spread sigma so both the min and max clamps actually trigger
    sigma = jax.random.uniform(k5, (n_basis, out_dim, in_dim),
                               minval=1.0, maxval=10.0, dtype=jnp.float32)
    mu = jnp.linspace(t_ext[0], t_ext[-1], n_basis + 2)[1:-1].astype(jnp.float32)

    # forward inputs a, b, c (kernel layout (nBatch, inDim, nSeq))
    a = jax.random.normal(k2, (n_batch, in_dim, n_seq), jnp.float32)
    b = 2.0 * jax.random.normal(k3, (n_batch, in_dim, n_seq), jnp.float32)
    c = 1.0 + 0.1 * jax.random.normal(k4, (n_batch, in_dim, n_seq), jnp.float32)

    # --- path 1: full 5D output (ifSumInDim=False), nSeq padded to one lane tile ---
    out = gaussian_basis_trf_forward(a, b, c, t, mu, sigma, coefs,
                                     sigma_min=sigma_min, sigma_max=sigma_max,
                                     include_constant_term=True,
                                     if_sum_in_dim=False)
    out = jax.block_until_ready(out)
    a5, b5, c5 = (v[:, None, :, None, :] for v in (a, b, c))
    ref = reference_forward(a5, b5, c5, t, mu, sigma, coefs,
                            sigma_min, sigma_max, True, False)
    assert out.shape == (n_batch, out_dim, in_dim, t.shape[0], n_seq)
    assert jnp.allclose(out, ref, atol=1e-5, rtol=1e-5), \
        float(jnp.max(jnp.abs(out - ref)))

    # --- path 2: fused inDim sum + multi-tile sequence axis ---
    n_seq2 = 200
    k6, k7, k8 = jax.random.split(k5, 3)
    a2 = jax.random.normal(k6, (n_batch, in_dim, n_seq2), jnp.float32)
    b2 = 2.0 * jax.random.normal(k7, (n_batch, in_dim, n_seq2), jnp.float32)
    c2 = 1.0 + 0.1 * jax.random.normal(k8, (n_batch, in_dim, n_seq2), jnp.float32)
    out2 = gaussian_basis_trf_forward(a2, b2, c2, t, mu, sigma, coefs,
                                      sigma_min=sigma_min, sigma_max=sigma_max,
                                      include_constant_term=True,
                                      if_sum_in_dim=True,
                                      seq_tile=128)          # 2 lane tiles of 128
    out2 = jax.block_until_ready(out2)
    a52, b52, c52 = (v[:, None, :, None, :] for v in (a2, b2, c2))
    ref2 = reference_forward(a52, b52, c52, t, mu, sigma, coefs,
                             sigma_min, sigma_max, True, True)
    assert out2.shape == (n_batch, out_dim, t.shape[0], n_seq2)
    assert jnp.allclose(out2, ref2, atol=1e-5, rtol=1e-5), \
        float(jnp.max(jnp.abs(out2 - ref2)))

    # TODO(synk): fitTRFs (numpy lstsq fit) and vis (matplotlib) are offline
    # utilities, not part of the forward hot path; not implemented in Pallas.
    # TODO(synk): optional bf16 exp path for v6e/v7x left out to keep v5e
    # compatibility and the exact f32 reference check.
    print("KERNEL_OK")
</pallas_src>

<mosaic_0001>
module attributes {stable_mosaic.version = 11 : i64} {
  func.func @gaussian_basis_trf_kernel(%arg0: i32, %arg1: i32, %arg2: i32, %arg3: memref<60xf32, #tpu.memory_space<smem>>, %arg4: memref<72xf32, #tpu.memory_space<smem>>, %arg5: memref<5xf32, #tpu.memory_space<smem>>, %arg6: memref<16x1xf32, #tpu.memory_space<vmem>>, %arg7: memref<1x3x128xf32, #tpu.memory_space<vmem>>, %arg8: memref<1x3x128xf32, #tpu.memory_space<vmem>>, %arg9: memref<1x3x128xf32, #tpu.memory_space<vmem>>, %arg10: memref<1x1x3x16x128xf32, #tpu.memory_space<vmem>>, %arg11: memref<3x16x128xf32, #tpu.memory_space<vmem>>) attributes {dimension_semantics = [#tpu.dimension_semantics<parallel>, #tpu.dimension_semantics<parallel>, #tpu.dimension_semantics<arbitrary>], iteration_bounds = array<i64: 2, 1, 4>, scalar_prefetch = 0 : i64, scratch_operands = 1 : i64, tpu.core_type = #tpu.core_type<tc>, window_params = [{transform_indices = @transform_0, window_bounds = array<i64: 60>}, {transform_indices = @transform_1, window_bounds = array<i64: 72>}, {transform_indices = @transform_2, window_bounds = array<i64: 5>}, {pipeline_mode = #tpu.pipeline_mode<synchronous>, transform_indices = @transform_3, window_bounds = array<i64: 16, 1>}, {transform_indices = @transform_4, window_bounds = array<i64: 1, 3, 128>}, {transform_indices = @transform_5, window_bounds = array<i64: 1, 3, 128>}, {transform_indices = @transform_6, window_bounds = array<i64: 1, 3, 128>}, {transform_indices = @transform_7, window_bounds = array<i64: 1, 1, 3, 16, 128>}]} {
    %c0_i32 = arith.constant 0 : i32
    %0 = arith.cmpi eq, %arg2, %c0_i32 : i32
    %1 = arith.extui %0 : i1 to i32
    %c0_i32_0 = arith.constant 0 : i32
    %2 = arith.cmpi ne, %1, %c0_i32_0 : i32
    scf.if %2 {
      %c0_104 = arith.constant 0 : index
      %c0_105 = arith.constant 0 : index
      %320 = vector.load %arg6[%c0_104, %c0_105] : memref<16x1xf32, #tpu.memory_space<vmem>>, vector<16x1xf32>
      %c0_106 = arith.constant 0 : index
      %c0_107 = arith.constant 0 : index
      %c0_108 = arith.constant 0 : index
      %321 = vector.load %arg8[%c0_106, %c0_107, %c0_108] : memref<1x3x128xf32, #tpu.memory_space<vmem>>, vector<1x3x128xf32>
      %322 = vector.shape_cast %321 : vector<1x3x128xf32> to vector<3x128xf32>
      %c0_109 = arith.constant 0 : index
      %c0_110 = arith.constant 0 : index
      %c0_111 = arith.constant 0 : index
      %323 = vector.load %arg9[%c0_109, %c0_110, %c0_111] : memref<1x3x128xf32, #tpu.memory_space<vmem>>, vector<1x3x128xf32>
      %324 = vector.shape_cast %323 : vector<1x3x128xf32> to vector<3x128xf32>
      %325 = vector.shape_cast %324 : vector<3x128xf32> to vector<3x1x128xf32>
      %326 = vector.shape_cast %320 : vector<16x1xf32> to vector<1x16x1xf32>
      %327 = vector.shape_cast %322 : vector<3x128xf32> to vector<3x1x128xf32>
      %328 = vector.broadcast %326 : vector<1x16x1xf32> to vector<3x16x128xf32>
      %329 = vector.broadcast %327 : vector<3x1x128xf32> to vector<3x16x128xf32>
      %330 = arith.subf %328, %329 : vector<3x16x128xf32>
      %331 = vector.broadcast %325 : vector<3x1x128xf32> to vector<3x16x128xf32>
      %332 = arith.mulf %331, %330 : vector<3x16x128xf32>
      %c0_112 = arith.constant 0 : index
      %c0_113 = arith.constant 0 : index
      %c0_114 = arith.constant 0 : index
      %333 = vector.load %arg11[%c0_112, %c0_113, %c0_114] : memref<3x16x128xf32, #tpu.memory_space<vmem>>, vector<3x16x128xf32>
      tpu.vector_store %arg11[%c0_112, %c0_113, %c0_114], %332 {strides = array<i32>} : memref<3x16x128xf32, #tpu.memory_space<vmem>>, vector<3x16x128xf32>,
    } else {
    }
    %c15_i32 = arith.constant 15 : i32
    %3 = arith.muli %arg2, %c15_i32 : i32
    %c18_i32 = arith.constant 18 : i32
    %4 = arith.muli %arg2, %c18_i32 : i32
    %c0 = arith.constant 0 : index
    %c0_1 = arith.constant 0 : index
    %c0_2 = arith.constant 0 : index
    %5 = vector.load %arg11[%c0, %c0_1, %c0_2] : memref<3x16x128xf32, #tpu.memory_space<vmem>>, vector<1x16x128xf32>
    %6 = vector.shape_cast %5 : vector<1x16x128xf32> to vector<16x128xf32>
    %c15_i32_3 = arith.constant 15 : i32
    %7 = arith.addi %4, %c15_i32_3 : i32
    %c0_i32_4 = arith.constant 0 : i32
    %8 = arith.addi %7, %c0_i32_4 : i32
    %9 = arith.index_cast %8 : i32 to index
    %10 = memref.load %arg4[%9] : memref<72xf32, #tpu.memory_space<smem>>
    %11 = vector.broadcast %10 : f32 to vector<16x128xf32>
    %c0_5 = arith.constant 0 : index
    %12 = memref.load %arg5[%c0_5] : memref<5xf32, #tpu.memory_space<smem>>
    %13 = vector.broadcast %12 : f32 to vector<16x128xf32>
    %14 = arith.subf %6, %13 : vector<16x128xf32>
    %c0_i32_6 = arith.constant 0 : i32
    %15 = arith.addi %4, %c0_i32_6 : i32
    %c0_i32_7 = arith.constant 0 : i32
    %16 = arith.addi %15, %c0_i32_7 : i32
    %17 = arith.index_cast %16 : i32 to index
    %18 = memref.load %arg4[%17] : memref<72xf32, #tpu.memory_space<smem>>
    %19 = arith.mulf %14, %14 : vector<16x128xf32>
    %c0_i32_8 = arith.constant 0 : i32
    %20 = arith.addi %3, %c0_i32_8 : i32
    %c0_i32_9 = arith.constant 0 : i32
    %21 = arith.addi %20, %c0_i32_9 : i32
    %22 = arith.index_cast %21 : i32 to index
    %23 = memref.load %arg3[%22] : memref<60xf32, #tpu.memory_space<smem>>
    %24 = vector.broadcast %23 : f32 to vector<16x128xf32>
    %25 = arith.mulf %19, %24 : vector<16x128xf32>
    %26 = math.exp %25 : vector<16x128xf32>
    %27 = vector.broadcast %18 : f32 to vector<16x128xf32>
    %28 = arith.mulf %27, %26 : vector<16x128xf32>
    %29 = arith.addf %11, %28 : vector<16x128xf32>
    %c1 = arith.constant 1 : index
    %30 = memref.load %arg5[%c1] : memref<5xf32, #tpu.memory_space<smem>>
    %31 = vector.broadcast %30 : f32 to vector<16x128xf32>
    %32 = arith.subf %6, %31 : vector<16x128xf32>
    %c3_i32 = arith.constant 3 : i32
    %33 = arith.addi %4, %c3_i32 : i32
    %c0_i32_10 = arith.constant 0 : i32
    %34 = arith.addi %33, %c0_i32_10 : i32
    %35 = arith.index_cast %34 : i32 to index
    %36 = memref.load %arg4[%35] : memref<72xf32, #tpu.memory_space<smem>>
    %37 = arith.mulf %32, %32 : vector<16x128xf32>
    %c3_i32_11 = arith.constant 3 : i32
    %38 = arith.addi %3, %c3_i32_11 : i32
    %c0_i32_12 = arith.constant 0 : i32
    %39 = arith.addi %38, %c0_i32_12 : i32
    %40 = arith.index_cast %39 : i32 to index
    %41 = memref.load %arg3[%40] : memref<60xf32, #tpu.memory_space<smem>>
    %42 = vector.broadcast %41 : f32 to vector<16x128xf32>
    %43 = arith.mulf %37, %42 : vector<16x128xf32>
    %44 = math.exp %43 : vector<16x128xf32>
    %45 = vector.broadcast %36 : f32 to vector<16x128xf32>
    %46 = arith.mulf %45, %44 : vector<16x128xf32>
    %47 = arith.addf %29, %46 : vector<16x128xf32>
    %c2 = arith.constant 2 : index
    %48 = memref.load %arg5[%c2] : memref<5xf32, #tpu.memory_space<smem>>
    %49 = vector.broadcast %48 : f32 to vector<16x128xf32>
    %50 = arith.subf %6, %49 : vector<16x128xf32>
    %c6_i32 = arith.constant 6 : i32
    %51 = arith.addi %4, %c6_i32 : i32
    %c0_i32_13 = arith.constant 0 : i32
    %52 = arith.addi %51, %c0_i32_13 : i32
    %53 = arith.index_cast %52 : i32 to index
    %54 = memref.load %arg4[%53] : memref<72xf32, #tpu.memory_space<smem>>
    %55 = arith.mulf %50, %50 : vector<16x128xf32>
    %c6_i32_14 = arith.constant 6 : i32
    %56 = arith.addi %3, %c6_i32_14 : i32
    %c0_i32_15 = arith.constant 0 : i32
    %57 = arith.addi %56, %c0_i32_15 : i32
    %58 = arith.index_cast %57 : i32 to index
    %59 = memref.load %arg3[%58] : memref<60xf32, #tpu.memory_space<smem>>
    %60 = vector.broadcast %59 : f32 to vector<16x128xf32>
    %61 = arith.mulf %55, %60 : vector<16x128xf32>
    %62 = math.exp %61 : vector<16x128xf32>
    %63 = vector.broadcast %54 : f32 to vector<16x128xf32>
    %64 = arith.mulf %63, %62 : vector<16x128xf32>
    %65 = arith.addf %47, %64 : vector<16x128xf32>
    %c3 = arith.constant 3 : index
    %66 = memref.load %arg5[%c3] : memref<5xf32, #tpu.memory_space<smem>>
    %67 = vector.broadcast %66 : f32 to vector<16x128xf32>
    %68 = arith.subf %6, %67 : vector<16x128xf32>
    %c9_i32 = arith.constant 9 : i32
    %69 = arith.addi %4, %c9_i32 : i32
    %c0_i32_16 = arith.constant 0 : i32
    %70 = arith.addi %69, %c0_i32_16 : i32
    %71 = arith.index_cast %70 : i32 to index
    %72 = memref.load %arg4[%71] : memref<72xf32, #tpu.memory_space<smem>>
    %73 = arith.mulf %68, %68 : vector<16x128xf32>
    %c9_i32_17 = arith.constant 9 : i32
    %74 = arith.addi %3, %c9_i32_17 : i32
    %c0_i32_18 = arith.constant 0 : i32
    %75 = arith.addi %74, %c0_i32_18 : i32
    %76 = arith.index_cast %75 : i32 to index
    %77 = memref.load %arg3[%76] : memref<60xf32, #tpu.memory_space<smem>>
    %78 = vector.broadcast %77 : f32 to vector<16x128xf32>
    %79 = arith.mulf %73, %78 : vector<16x128xf32>
    %80 = math.exp %79 : vector<16x128xf32>
    %81 = vector.broadcast %72 : f32 to vector<16x128xf32>
    %82 = arith.mulf %81, %80 : vector<16x128xf32>
    %83 = arith.addf %65, %82 : vector<16x128xf32>
    %c4 = arith.constant 4 : index
    %84 = memref.load %arg5[%c4] : memref<5xf32, #tpu.memory_space<smem>>
    %85 = vector.broadcast %84 : f32 to vector<16x128xf32>
    %86 = arith.subf %6, %85 : vector<16x128xf32>
    %c12_i32 = arith.constant 12 : i32
    %87 = arith.addi %4, %c12_i32 : i32
    %c0_i32_19 = arith.constant 0 : i32
    %88 = arith.addi %87, %c0_i32_19 : i32
    %89 = arith.index_cast %88 : i32 to index
    %90 = memref.load %arg4[%89] : memref<72xf32, #tpu.memory_space<smem>>
    %91 = arith.mulf %86, %86 : vector<16x128xf32>
    %c12_i32_20 = arith.constant 12 : i32
    %92 = arith.addi %3, %c12_i32_20 : i32
    %c0_i32_21 = arith.constant 0 : i32
    %93 = arith.addi %92, %c0_i32_21 : i32
    %94 = arith.index_cast %93 : i32 to index
    %95 = memref.load %arg3[%94] : memref<60xf32, #tpu.memory_space<smem>>
    %96 = vector.broadcast %95 : f32 to vector<16x128xf32>
    %97 = arith.mulf %91, %96 : vector<16x128xf32>
    %98 = math.exp %97 : vector<16x128xf32>
    %99 = vector.broadcast %90 : f32 to vector<16x128xf32>
    %100 = arith.mulf %99, %98 : vector<16x128xf32>
    %101 = arith.addf %83, %100 : vector<16x128xf32>
    %c0_22 = arith.constant 0 : index
    %c0_23 = arith.constant 0 : index
    %c0_24 = arith.constant 0 : index
    %102 = vector.load %arg7[%c0_22, %c0_23, %c0_24] : memref<1x3x128xf32, #tpu.memory_space<vmem>>, vector<1x1x128xf32>
    %103 = vector.shape_cast %102 : vector<1x1x128xf32> to vector<128xf32>
    %104 = vector.shape_cast %103 : vector<128xf32> to vector<1x128xf32>
    %105 = vector.broadcast %104 : vector<1x128xf32> to vector<16x128xf32>
    %106 = arith.mulf %105, %101 : vector<16x128xf32>
    %c0_25 = arith.constant 0 : index
    %c0_26 = arith.constant 0 : index
    %c0_27 = arith.constant 0 : index
    %c0_28 = arith.constant 0 : index
    %c0_29 = arith.constant 0 : index
    %107 = vector.load %arg10[%c0_25, %c0_26, %c0_27, %c0_28, %c0_29] : memref<1x1x3x16x128xf32, #tpu.memory_space<vmem>>, vector<1x1x1x16x128xf32>
    %108 = vector.shape_cast %107 : vector<1x1x1x16x128xf32> to vector<16x128xf32>
    %109 = vector.shape_cast %106 : vector<16x128xf32> to vector<1x1x1x16x128xf32>
    tpu.vector_store %arg10[%c0_25, %c0_26, %c0_27, %c0_28, %c0_29], %109 {strides = array<i32>} : memref<1x1x3x16x128xf32, #tpu.memory_space<vmem>>, vector<1x1x1x16x128xf32>,
    %c1_30 = arith.constant 1 : index
    %c0_31 = arith.constant 0 : index
    %c0_32 = arith.constant 0 : index
    %110 = vector.load %arg11[%c1_30, %c0_31, %c0_32] : memref<3x16x128xf32, #tpu.memory_space<vmem>>, vector<1x16x128xf32>
    %111 = vector.shape_cast %110 : vector<1x16x128xf32> to vector<16x128xf32>
    %c15_i32_33 = arith.constant 15 : i32
    %112 = arith.addi %4, %c15_i32_33 : i32
    %c1_i32 = arith.constant 1 : i32
    %113 = arith.addi %112, %c1_i32 : i32
    %114 = arith.index_cast %113 : i32 to index
    %115 = memref.load %arg4[%114] : memref<72xf32, #tpu.memory_space<smem>>
    %116 = vector.broadcast %115 : f32 to vector<16x128xf32>
    %c0_34 = arith.constant 0 : index
    %117 = memref.load %arg5[%c0_34] : memref<5xf32, #tpu.memory_space<smem>>
    %118 = vector.broadcast %117 : f32 to vector<16x128xf32>
    %119 = arith.subf %111, %118 : vector<16x128xf32>
    %c0_i32_35 = arith.constant 0 : i32
    %120 = arith.addi %4, %c0_i32_35 : i32
    %c1_i32_36 = arith.constant 1 : i32
    %121 = arith.addi %120, %c1_i32_36 : i32
    %122 = arith.index_cast %121 : i32 to index
    %123 = memref.load %arg4[%122] : memref<72xf32, #tpu.memory_space<smem>>
    %124 = arith.mulf %119, %119 : vector<16x128xf32>
    %c0_i32_37 = arith.constant 0 : i32
    %125 = arith.addi %3, %c0_i32_37 : i32
    %c1_i32_38 = arith.constant 1 : i32
    %126 = arith.addi %125, %c1_i32_38 : i32
    %127 = arith.index_cast %126 : i32 to index
    %128 = memref.load %arg3[%127] : memref<60xf32, #tpu.memory_space<smem>>
    %129 = vector.broadcast %128 : f32 to vector<16x128xf32>
    %130 = arith.mulf %124, %129 : vector<16x128xf32>
    %131 = math.exp %130 : vector<16x128xf32>
    %132 = vector.broadcast %123 : f32 to vector<16x128xf32>
    %133 = arith.mulf %132, %131 : vector<16x128xf32>
    %134 = arith.addf %116, %133 : vector<16x128xf32>
    %c1_39 = arith.constant 1 : index
    %135 = memref.load %arg5[%c1_39] : memref<5xf32, #tpu.memory_space<smem>>
    %136 = vector.broadcast %135 : f32 to vector<16x128xf32>
    %137 = arith.subf %111, %136 : vector<16x128xf32>
    %c3_i32_40 = arith.constant 3 : i32
    %138 = arith.addi %4, %c3_i32_40 : i32
    %c1_i32_41 = arith.constant 1 : i32
    %139 = arith.addi %138, %c1_i32_41 : i32
    %140 = arith.index_cast %139 : i32 to index
    %141 = memref.load %arg4[%140] : memref<72xf32, #tpu.memory_space<smem>>
    %142 = arith.mulf %137, %137 : vector<16x128xf32>
    %c3_i32_42 = arith.constant 3 : i32
    %143 = arith.addi %3, %c3_i32_42 : i32
    %c1_i32_43 = arith.constant 1 : i32
    %144 = arith.addi %143, %c1_i32_43 : i32
    %145 = arith.index_cast %144 : i32 to index
    %146 = memref.load %arg3[%145] : memref<60xf32, #tpu.memory_space<smem>>
    %147 = vector.broadcast %146 : f32 to vector<16x128xf32>
    %148 = arith.mulf %142, %147 : vector<16x128xf32>
    %149 = math.exp %148 : vector<16x128xf32>
    %150 = vector.broadcast %141 : f32 to vector<16x128xf32>
    %151 = arith.mulf %150, %149 : vector<16x128xf32>
    %152 = arith.addf %134, %151 : vector<16x128xf32>
    %c2_44 = arith.constant 2 : index
    %153 = memref.load %arg5[%c2_44] : memref<5xf32, #tpu.memory_space<smem>>
    %154 = vector.broadcast %153 : f32 to vector<16x128xf32>
    %155 = arith.subf %111, %154 : vector<16x128xf32>
    %c6_i32_45 = arith.constant 6 : i32
    %156 = arith.addi %4, %c6_i32_45 : i32
    %c1_i32_46 = arith.constant 1 : i32
    %157 = arith.addi %156, %c1_i32_46 : i32
    %158 = arith.index_cast %157 : i32 to index
    %159 = memref.load %arg4[%158] : memref<72xf32, #tpu.memory_space<smem>>
    %160 = arith.mulf %155, %155 : vector<16x128xf32>
    %c6_i32_47 = arith.constant 6 : i32
    %161 = arith.addi %3, %c6_i32_47 : i32
    %c1_i32_48 = arith.constant 1 : i32
    %162 = arith.addi %161, %c1_i32_48 : i32
    %163 = arith.index_cast %162 : i32 to index
    %164 = memref.load %arg3[%163] : memref<60xf32, #tpu.memory_space<smem>>
    %165 = vector.broadcast %164 : f32 to vector<16x128xf32>
    %166 = arith.mulf %160, %165 : vector<16x128xf32>
    %167 = math.exp %166 : vector<16x128xf32>
    %168 = vector.broadcast %159 : f32 to vector<16x128xf32>
    %169 = arith.mulf %168, %167 : vector<16x128xf32>
    %170 = arith.addf %152, %169 : vector<16x128xf32>
    %c3_49 = arith.constant 3 : index
    %171 = memref.load %arg5[%c3_49] : memref<5xf32, #tpu.memory_space<smem>>
    %172 = vector.broadcast %171 : f32 to vector<16x128xf32>
    %173 = arith.subf %111, %172 : vector<16x128xf32>
    %c9_i32_50 = arith.constant 9 : i32
    %174 = arith.addi %4, %c9_i32_50 : i32
    %c1_i32_51 = arith.constant 1 : i32
    %175 = arith.addi %174, %c1_i32_51 : i32
    %176 = arith.index_cast %175 : i32 to index
    %177 = memref.load %arg4[%176] : memref<72xf32, #tpu.memory_space<smem>>
    %178 = arith.mulf %173, %173 : vector<16x128xf32>
    %c9_i32_52 = arith.constant 9 : i32
    %179 = arith.addi %3, %c9_i32_52 : i32
    %c1_i32_53 = arith.constant 1 : i32
    %180 = arith.addi %179, %c1_i32_53 : i32
    %181 = arith.index_cast %180 : i32 to index
    %182 = memref.load %arg3[%181] : memref<60xf32, #tpu.memory_space<smem>>
    %183 = vector.broadcast %182 : f32 to vector<16x128xf32>
    %184 = arith.mulf %178, %183 : vector<16x128xf32>
    %185 = math.exp %184 : vector<16x128xf32>
    %186 = vector.broadcast %177 : f32 to vector<16x128xf32>
    %187 = arith.mulf %186, %185 : vector<16x128xf32>
    %188 = arith.addf %170, %187 : vector<16x128xf32>
    %c4_54 = arith.constant 4 : index
    %189 = memref.load %arg5[%c4_54] : memref<5xf32, #tpu.memory_space<smem>>
    %190 = vector.broadcast %189 : f32 to vector<16x128xf32>
    %191 = arith.subf %111, %190 : vector<16x128xf32>
    %c12_i32_55 = arith.constant 12 : i32
    %192 = arith.addi %4, %c12_i32_55 : i32
    %c1_i32_56 = arith.constant 1 : i32
    %193 = arith.addi %192, %c1_i32_56 : i32
    %194 = arith.index_cast %193 : i32 to index
    %195 = memref.load %arg4[%194] : memref<72xf32, #tpu.memory_space<smem>>
    %196 = arith.mulf %191, %191 : vector<16x128xf32>
    %c12_i32_57 = arith.constant 12 : i32
    %197 = arith.addi %3, %c12_i32_57 : i32
    %c1_i32_58 = arith.constant 1 : i32
    %198 = arith.addi %197, %c1_i32_58 : i32
    %199 = arith.index_cast %198 : i32 to index
    %200 = memref.load %arg3[%199] : memref<60xf32, #tpu.memory_space<smem>>
    %201 = vector.broadcast %200 : f32 to vector<16x128xf32>
    %202 = arith.mulf %196, %201 : vector<16x128xf32>
    %203 = math.exp %202 : vector<16x128xf32>
    %204 = vector.broadcast %195 : f32 to vector<16x128xf32>
    %205 = arith.mulf %204, %203 : vector<16x128xf32>
    %206 = arith.addf %188, %205 : vector<16x128xf32>
    %c0_59 = arith.constant 0 : index
    %c1_60 = arith.constant 1 : index
    %c0_61 = arith.constant 0 : index
    %207 = vector.load %arg7[%c0_59, %c1_60, %c0_61] : memref<1x3x128xf32, #tpu.memory_space<vmem>>, vector<1x1x128xf32>
    %208 = vector.shape_cast %207 : vector<1x1x128xf32> to vector<128xf32>
    %209 = vector.shape_cast %208 : vector<128xf32> to vector<1x128xf32>
    %210 = vector.broadcast %209 : vector<1x128xf32> to vector<16x128xf32>
    %211 = arith.mulf %210, %206 : vector<16x128xf32>
    %c0_62 = arith.constant 0 : index
    %c0_63 = arith.constant 0 : index
    %c1_64 = arith.constant 1 : index
    %c0_65 = arith.constant 0 : index
    %c0_66 = arith.constant 0 : index
    %212 = vector.load %arg10[%c0_62, %c0_63, %c1_64, %c0_65, %c0_66] : memref<1x1x3x16x128xf32, #tpu.memory_space<vmem>>, vector<1x1x1x16x128xf32>
    %213 = vector.shape_cast %212 : vector<1x1x1x16x128xf32> to vector<16x128xf32>
    %214 = vector.shape_cast %211 : vector<16x128xf32> to vector<1x1x1x16x128xf32>
    tpu.vector_store %arg10[%c0_62, %c0_63, %c1_64, %c0_65, %c0_66], %214 {strides = array<i32>} : memref<1x1x3x16x128xf32, #tpu.memory_space<vmem>>, vector<1x1x1x16x128xf32>,
    %c2_67 = arith.constant 2 : index
    %c0_68 = arith.constant 0 : index
    %c0_69 = arith.constant 0 : index
    %215 = vector.load %arg11[%c2_67, %c0_68, %c0_69] : memref<3x16x128xf32, #tpu.memory_space<vmem>>, vector<1x16x128xf32>
    %216 = vector.shape_cast %215 : vector<1x16x128xf32> to vector<16x128xf32>
    %c15_i32_70 = arith.constant 15 : i32
    %217 = arith.addi %4, %c15_i32_70 : i32
    %c2_i32 = arith.constant 2 : i32
    %218 = arith.addi %217, %c2_i32 : i32
    %219 = arith.index_cast %218 : i32 to index
    %220 = memref.load %arg4[%219] : memref<72xf32, #tpu.memory_space<smem>>
    %221 = vector.broadcast %220 : f32 to vector<16x128xf32>
    %c0_71 = arith.constant 0 : index
    %222 = memref.load %arg5[%c0_71] : memref<5xf32, #tpu.memory_space<smem>>
    %223 = vector.broadcast %222 : f32 to vector<16x128xf32>
    %224 = arith.subf %216, %223 : vector<16x128xf32>
    %c0_i32_72 = arith.constant 0 : i32
    %225 = arith.addi %4, %c0_i32_72 : i32
    %c2_i32_73 = arith.constant 2 : i32
    %226 = arith.addi %225, %c2_i32_73 : i32
    %227 = arith.index_cast %226 : i32 to index
    %228 = memref.load %arg4[%227] : memref<72xf32, #tpu.memory_space<smem>>
    %229 = arith.mulf %224, %224 : vector<16x128xf32>
    %c0_i32_74 = arith.constant 0 : i32
    %230 = arith.addi %3, %c0_i32_74 : i32
    %c2_i32_75 = arith.constant 2 : i32
    %231 = arith.addi %230, %c2_i32_75 : i32
    %232 = arith.index_cast %231 : i32 to index
    %233 = memref.load %arg3[%232] : memref<60xf32, #tpu.memory_space<smem>>
    %234 = vector.broadcast %233 : f32 to vector<16x128xf32>
    %235 = arith.mulf %229, %234 : vector<16x128xf32>
    %236 = math.exp %235 : vector<16x128xf32>
    %237 = vector.broadcast %228 : f32 to vector<16x128xf32>
    %238 = arith.mulf %237, %236 : vector<16x128xf32>
    %239 = arith.addf %221, %238 : vector<16x128xf32>
    %c1_76 = arith.constant 1 : index
    %240 = memref.load %arg5[%c1_76] : memref<5xf32, #tpu.memory_space<smem>>
    %241 = vector.broadcast %240 : f32 to vector<16x128xf32>
    %242 = arith.subf %216, %241 : vector<16x128xf32>
    %c3_i32_77 = arith.constant 3 : i32
    %243 = arith.addi %4, %c3_i32_77 : i32
    %c2_i32_78 = arith.constant 2 : i32
    %244 = arith.addi %243, %c2_i32_78 : i32
    %245 = arith.index_cast %244 : i32 to index
    %246 = memref.load %arg4[%245] : memref<72xf32, #tpu.memory_space<smem>>
    %247 = arith.mulf %242, %242 : vector<16x128xf32>
    %c3_i32_79 = arith.constant 3 : i32
    %248 = arith.addi %3, %c3_i32_79 : i32
    %c2_i32_80 = arith.constant 2 : i32
    %249 = arith.addi %248, %c2_i32_80 : i32
    %250 = arith.index_cast %249 : i32 to index
    %251 = memref.load %arg3[%250] : memref<60xf32, #tpu.memory_space<smem>>
    %252 = vector.broadcast %251 : f32 to vector<16x128xf32>
    %253 = arith.mulf %247, %252 : vector<16x128xf32>
    %254 = math.exp %253 : vector<16x128xf32>
    %255 = vector.broadcast %246 : f32 to vector<16x128xf32>
    %256 = arith.mulf %255, %254 : vector<16x128xf32>
    %257 = arith.addf %239, %256 : vector<16x128xf32>
    %c2_81 = arith.constant 2 : index
    %258 = memref.load %arg5[%c2_81] : memref<5xf32, #tpu.memory_space<smem>>
    %259 = vector.broadcast %258 : f32 to vector<16x128xf32>
    %260 = arith.subf %216, %259 : vector<16x128xf32>
    %c6_i32_82 = arith.constant 6 : i32
    %261 = arith.addi %4, %c6_i32_82 : i32
    %c2_i32_83 = arith.constant 2 : i32
    %262 = arith.addi %261, %c2_i32_83 : i32
    %263 = arith.index_cast %262 : i32 to index
    %264 = memref.load %arg4[%263] : memref<72xf32, #tpu.memory_space<smem>>
    %265 = arith.mulf %260, %260 : vector<16x128xf32>
    %c6_i32_84 = arith.constant 6 : i32
    %266 = arith.addi %3, %c6_i32_84 : i32
    %c2_i32_85 = arith.constant 2 : i32
    %267 = arith.addi %266, %c2_i32_85 : i32
    %268 = arith.index_cast %267 : i32 to index
    %269 = memref.load %arg3[%268] : memref<60xf32, #tpu.memory_space<smem>>
    %270 = vector.broadcast %269 : f32 to vector<16x128xf32>
    %271 = arith.mulf %265, %270 : vector<16x128xf32>
    %272 = math.exp %271 : vector<16x128xf32>
    %273 = vector.broadcast %264 : f32 to vector<16x128xf32>
    %274 = arith.mulf %273, %272 : vector<16x128xf32>
    %275 = arith.addf %257, %274 : vector<16x128xf32>
    %c3_86 = arith.constant 3 : index
    %276 = memref.load %arg5[%c3_86] : memref<5xf32, #tpu.memory_space<smem>>
    %277 = vector.broadcast %276 : f32 to vector<16x128xf32>
    %278 = arith.subf %216, %277 : vector<16x128xf32>
    %c9_i32_87 = arith.constant 9 : i32
    %279 = arith.addi %4, %c9_i32_87 : i32
    %c2_i32_88 = arith.constant 2 : i32
    %280 = arith.addi %279, %c2_i32_88 : i32
    %281 = arith.index_cast %280 : i32 to index
    %282 = memref.load %arg4[%281] : memref<72xf32, #tpu.memory_space<smem>>
    %283 = arith.mulf %278, %278 : vector<16x128xf32>
    %c9_i32_89 = arith.constant 9 : i32
    %284 = arith.addi %3, %c9_i32_89 : i32
    %c2_i32_90 = arith.constant 2 : i32
    %285 = arith.addi %284, %c2_i32_90 : i32
    %286 = arith.index_cast %285 : i32 to index
    %287 = memref.load %arg3[%286] : memref<60xf32, #tpu.memory_space<smem>>
    %288 = vector.broadcast %287 : f32 to vector<16x128xf32>
    %289 = arith.mulf %283, %288 : vector<16x128xf32>
    %290 = math.exp %289 : vector<16x128xf32>
    %291 = vector.broadcast %282 : f32 to vector<16x128xf32>
    %292 = arith.mulf %291, %290 : vector<16x128xf32>
    %293 = arith.addf %275, %292 : vector<16x128xf32>
    %c4_91 = arith.constant 4 : index
    %294 = memref.load %arg5[%c4_91] : memref<5xf32, #tpu.memory_space<smem>>
    %295 = vector.broadcast %294 : f32 to vector<16x128xf32>
    %296 = arith.subf %216, %295 : vector<16x128xf32>
    %c12_i32_92 = arith.constant 12 : i32
    %297 = arith.addi %4, %c12_i32_92 : i32
    %c2_i32_93 = arith.constant 2 : i32
    %298 = arith.addi %297, %c2_i32_93 : i32
    %299 = arith.index_cast %298 : i32 to index
    %300 = memref.load %arg4[%299] : memref<72xf32, #tpu.memory_space<smem>>
    %301 = arith.mulf %296, %296 : vector<16x128xf32>
    %c12_i32_94 = arith.constant 12 : i32
    %302 = arith.addi %3, %c12_i32_94 : i32
    %c2_i32_95 = arith.constant 2 : i32
    %303 = arith.addi %302, %c2_i32_95 : i32
    %304 = arith.index_cast %303 : i32 to index
    %305 = memref.load %arg3[%304] : memref<60xf32, #tpu.memory_space<smem>>
    %306 = vector.broadcast %305 : f32 to vector<16x128xf32>
    %307 = arith.mulf %301, %306 : vector<16x128xf32>
    %308 = math.exp %307 : vector<16x128xf32>
    %309 = vector.broadcast %300 : f32 to vector<16x128xf32>
    %310 = arith.mulf %309, %308 : vector<16x128xf32>
    %311 = arith.addf %293, %310 : vector<16x128xf32>
    %c0_96 = arith.constant 0 : index
    %c2_97 = arith.constant 2 : index
    %c0_98 = arith.constant 0 : index
    %312 = vector.load %arg7[%c0_96, %c2_97, %c0_98] : memref<1x3x128xf32, #tpu.memory_space<vmem>>, vector<1x1x128xf32>
    %313 = vector.shape_cast %312 : vector<1x1x128xf32> to vector<128xf32>
    %314 = vector.shape_cast %313 : vector<128xf32> to vector<1x128xf32>
    %315 = vector.broadcast %314 : vector<1x128xf32> to vector<16x128xf32>
    %316 = arith.mulf %315, %311 : vector<16x128xf32>
    %c0_99 = arith.constant 0 : index
    %c0_100 = arith.constant 0 : index
    %c2_101 = arith.constant 2 : index
    %c0_102 = arith.constant 0 : index
    %c0_103 = arith.constant 0 : index
    %317 = vector.load %arg10[%c0_99, %c0_100, %c2_101, %c0_102, %c0_103] : memref<1x1x3x16x128xf32, #tpu.memory_space<vmem>>, vector<1x1x1x16x128xf32>
    %318 = vector.shape_cast %317 : vector<1x1x1x16x128xf32> to vector<16x128xf32>
    %319 = vector.shape_cast %316 : vector<16x128xf32> to vector<1x1x1x16x128xf32>
    tpu.vector_store %arg10[%c0_99, %c0_100, %c2_101, %c0_102, %c0_103], %319 {strides = array<i32>} : memref<1x1x3x16x128xf32, #tpu.memory_space<vmem>>, vector<1x1x1x16x128xf32>,
    return
  }
  func.func @transform_0(%arg0: i32, %arg1: i32, %arg2: i32) -> i32 {
    %c0_i32 = arith.constant 0 : i32
    %c0_i32_0 = arith.constant 0 : i32
    return %c0_i32 : i32
  }
  func.func @transform_1(%arg0: i32, %arg1: i32, %arg2: i32) -> i32 {
    %c0_i32 = arith.constant 0 : i32
    %c0_i32_0 = arith.constant 0 : i32
    return %c0_i32 : i32
  }
  func.func @transform_2(%arg0: i32, %arg1: i32, %arg2: i32) -> i32 {
    %c0_i32 = arith.constant 0 : i32
    %c0_i32_0 = arith.constant 0 : i32
    return %c0_i32 : i32
  }
  func.func @transform_3(%arg0: i32, %arg1: i32, %arg2: i32) -> (i32, i32) {
    %c0_i32 = arith.constant 0 : i32
    %c0_i32_0 = arith.constant 0 : i32
    %c0_i32_1 = arith.constant 0 : i32
    return %c0_i32, %c0_i32_0 : i32, i32
  }
  func.func @transform_4(%arg0: i32, %arg1: i32, %arg2: i32) -> (i32, i32, i32) {
    %c0_i32 = arith.constant 0 : i32
    %c0_i32_0 = arith.constant 0 : i32
    return %arg0, %c0_i32, %arg1 : i32, i32, i32
  }
  func.func @transform_5(%arg0: i32, %arg1: i32, %arg2: i32) -> (i32, i32, i32) {
    %c0_i32 = arith.constant 0 : i32
    %c0_i32_0 = arith.constant 0 : i32
    return %arg0, %c0_i32, %arg1 : i32, i32, i32
  }
  func.func @transform_6(%arg0: i32, %arg1: i32, %arg2: i32) -> (i32, i32, i32) {
    %c0_i32 = arith.constant 0 : i32
    %c0_i32_0 = arith.constant 0 : i32
    return %arg0, %c0_i32, %arg1 : i32, i32, i32
  }
  func.func @transform_7(%arg0: i32, %arg1: i32, %arg2: i32) -> (i32, i32, i32, i32, i32) {
    %c0_i32 = arith.constant 0 : i32
    %c0_i32_0 = arith.constant 0 : i32
    %c0_i32_1 = arith.constant 0 : i32
    return %arg0, %arg2, %c0_i32, %c0_i32_0, %arg1 : i32, i32, i32, i32, i32
  }
}

</mosaic_0001>

<llo_original>
// kernel: tpu_custom_call.1
$region0: #{tpu_custom_call.1}
  #allocation0 [shape = 'u32[]', space=smem, size = 0x4, offset = 0x4, fixed_abs, tag = 'smem constant byte address 0x4 - core index']
  #allocation1 [shape = 'u32[144,128]{1,0:T(1,128)}', space=vmem, size = 0x12000, scoped, tag = 'internal scratch']
  #allocation2 [shape = 'f32[3,16,128]{2,1,0:T(8,128)}', space=vmem, size = 0x6000, scoped, tag = 'scratch operand']
  %s0 = inlined_call_operand.vmem [shape: f32[60], index: 0, kind: input, shape index: {}]
  %s1 = inlined_call_operand.vmem [shape: f32[72], index: 1, kind: input, shape index: {}]
  %s2 = inlined_call_operand.vmem [shape: f32[5], index: 2, kind: input, shape index: {}]
  %s3 = inlined_call_operand.vmem [shape: f32[16,1], index: 3, kind: input, shape index: {}]
  %s4 = inlined_call_operand.vmem [shape: f32[2,3,128], index: 4, kind: input, shape index: {}]
  %s5 = inlined_call_operand.vmem [shape: f32[2,3,128], index: 5, kind: input, shape index: {}]
  %s6 = inlined_call_operand.vmem [shape: f32[2,3,128], index: 6, kind: input, shape index: {}]
  %s7 = inlined_call_operand.hbm [shape: f32[2,4,3,16,128], index: 7, kind: output, shape index: {}]
  %s8 = sld [smem:[#allocation0]]
  $region77: #{tpu_custom_call.1} parent=0
    _
  %s10 = ssub.s32 1, %s8
  %s11 = scalar_select 0, %s10, %s8
  $region1: #{tpu_custom_call.1} parent=0
    #allocation3 [shape = 'u8[512]{0}', space=smem, size = 0x200, scoped, tag = 'input window, operand 0, single buffered']
    #allocation4 [shape = 's32[2]{0}', space=sflag, size = 0x8, scoped, tag = 'scoped memory for tpu_custom_call.1']
    #allocation5 [shape = 's32[2]{0}', space=sflag, size = 0x8, scoped, tag = 'scoped memory for tpu_custom_call.1']
    #allocation6 [shape = 'u8[512]{0}', space=smem, size = 0x200, scoped, tag = 'input window, operand 1, single buffered']
    #allocation7 [shape = 's32[1]{0}', space=sflag, size = 0x4, scoped, tag = 'scoped memory for tpu_custom_call.1']
    #allocation8 [shape = 'u8[512]{0}', space=smem, size = 0x200, scoped, tag = 'input window, operand 2, single buffered']
    #allocation9 [shape = 'u8[49152]{0}', space=vmem, size = 0xc000, scoped, tag = 'output window, operand 0']
    %12 = vsyncpa [#allocation5], 0
    %13 = vsyncpa [#allocation7], 0
    %14 = vsyncpa [#allocation4], 0
    %s15 = scalar_lea.sflag [#allocation4], 1
    %16 = vsyncpa %s15, 0
    loop: start=0, step=1, limit=10
    $region2: #{tpu_custom_call.1} parent=1 // loop_pre_header
      _
    $region3: #{tpu_custom_call.1} parent=1 // loop_header
      %s18 = sphi 0, %s22
      %p19 = scmp.ge.s32.totalorder %s18, 10
      %s25 = sphi 0, %s44
      %s26 = sphi 0, %s40
      %s27 = sphi 0, %s36
      %s28 = sphi 0, %s25
      %s29 = sphi 0, %s26
      %s30 = sphi 0, %s27
      %s31 = sphi 0, %s28
      %s32 = sphi 0, %s29
      %s33 = sphi 0, %s30
      %s45 = sphi 0, %s45
      %s47 = sphi 0, %s45
      %s48 = sphi 0, %s47
      %s62 = sphi 0, %s48
      %s66 = sphi 0, %s66
      %s68 = sphi 0, %s66
      %s69 = sphi 0, %s68
      %s83 = sphi 0, %s69
      %s87 = sphi 0, %s87
      %s89 = sphi 0, %s87
      %s90 = sphi 0, %s89
      %s104 = sphi 0, %s90
      %s108 = sphi 0, %s108
      %s110 = sphi 0, %s108
      %s111 = sphi 0, %s110
      %s125 = sphi 0, %s111
      %s133 = sphi 0, %s135
      %s136 = sphi 0, %s133
      %s137 = sphi 0, %s136
      %s153 = sphi 0, %s137
      %s161 = sphi 0, %s163
      %s164 = sphi 0, %s161
      %s165 = sphi 0, %s164
      %s181 = sphi 0, %s165
      %s189 = sphi 0, %s191
      %s192 = sphi 0, %s189
      %s193 = sphi 0, %s192
      %s209 = sphi 0, %s193
      %s219 = sphi 0, %s221
      %s222 = sphi 0, %s219
      %s223 = sphi 0, %s222
      %s239 = sphi 0, %s223
    $region4: #{tpu_custom_call.1} parent=1 // loop_header_branch
      %21 = sbr.rel (%p19) target = $region8
    $region5: #{tpu_custom_call.1} parent=1 // loop_body
      %s23 = ssub.s32 %s18, 1
      %s24 = ssub.s32 %s18, 2
      %s34 = sadd.s32 1, %s27
      %p35 = scmp.ge.s32.totalorder %s34, 4
      %s36 = scalar_select %p35, 0, %s34
      %s37 = sadd.s32 1, %s26
      %s38 = scalar_select %p35, %s37, %s26
      %p39 = scmp.ge.s32.totalorder %s38, 1
      %s40 = scalar_select %p39, 0, %s38
      %s41 = sadd.s32 1, %s25
      %s42 = scalar_select %p39, %s41, %s25
      %p43 = scmp.ge.s32.totalorder %s42, 2
      %s44 = scalar_select %p43, 0, %s42
      %s46 = sadd.s32 %s45, 1
      %p49 = scmp.eq.s32.totalorder %s18, 7
      %p50 = scmp.ne.s32.totalorder %s45, %s47
      %p51 = scmp.eq.s32.totalorder %s18, 0
      %p52 = por %p50, %p51
      %p53 = scmp.ne.s32.totalorder %s45, %s47
      %p54 = scmp.eq.s32.totalorder %s23, 7
      %p55 = por %p53, %p54
      %p56 = scmp.ne.s32.totalorder %s47, %s48
      %p57 = scmp.eq.s32.totalorder %s23, 0
      %p58 = por %p56, %p57
      %p59 = scmp.ne.s32.totalorder %s47, %s48
      %p60 = scmp.eq.s32.totalorder %s24, 7
      %p61 = por %p59, %p60
      %p63 = scmp.ne.s32.totalorder %s48, %s62
      %p64 = scmp.eq.s32.totalorder %s24, 0
      %p65 = por %p63, %p64
      %s67 = sadd.s32 %s66, 1
      %p70 = scmp.eq.s32.totalorder %s18, 7
      %p71 = scmp.ne.s32.totalorder %s66, %s68
      %p72 = scmp.eq.s32.totalorder %s18, 0
      %p73 = por %p71, %p72
      %p74 = scmp.ne.s32.totalorder %s66, %s68
      %p75 = scmp.eq.s32.totalorder %s23, 7
      %p76 = por %p74, %p75
      %p77 = scmp.ne.s32.totalorder %s68, %s69
      %p78 = scmp.eq.s32.totalorder %s23, 0
      %p79 = por %p77, %p78
      %p80 = scmp.ne.s32.totalorder %s68, %s69
      %p81 = scmp.eq.s32.totalorder %s24, 7
      %p82 = por %p80, %p81
      %p84 = scmp.ne.s32.totalorder %s69, %s83
      %p85 = scmp.eq.s32.totalorder %s24, 0
      %p86 = por %p84, %p85
      %s88 = sadd.s32 %s87, 1
      %p91 = scmp.eq.s32.totalorder %s18, 7
      %p92 = scmp.ne.s32.totalorder %s87, %s89
      %p93 = scmp.eq.s32.totalorder %s18, 0
      %p94 = por %p92, %p93
      %p95 = scmp.ne.s32.totalorder %s87, %s89
      %p96 = scmp.eq.s32.totalorder %s23, 7
      %p97 = por %p95, %p96
      %p98 = scmp.ne.s32.totalorder %s89, %s90
      %p99 = scmp.eq.s32.totalorder %s23, 0
      %p100 = por %p98, %p99
      %p101 = scmp.ne.s32.totalorder %s89, %s90
      %p102 = scmp.eq.s32.totalorder %s24, 7
      %p103 = por %p101, %p102
      %p105 = scmp.ne.s32.totalorder %s90, %s104
      %p106 = scmp.eq.s32.totalorder %s24, 0
      %p107 = por %p105, %p106
      %s109 = sadd.s32 %s108, 1
      %p112 = scmp.eq.s32.totalorder %s18, 7
      %p113 = scmp.ne.s32.totalorder %s108, %s110
      %p114 = scmp.eq.s32.totalorder %s18, 0
      %p115 = por %p113, %p114
      %p116 = scmp.ne.s32.totalorder %s108, %s110
      %p117 = scmp.eq.s32.totalorder %s23, 7
      %p118 = por %p116, %p117
      %p119 = scmp.ne.s32.totalorder %s110, %s111
      %p120 = scmp.eq.s32.totalorder %s23, 0
      %p121 = por %p119, %p120
      %p122 = scmp.ne.s32.totalorder %s110, %s111
      %p123 = scmp.eq.s32.totalorder %s24, 7
      %p124 = por %p122, %p123
      %p126 = scmp.ne.s32.totalorder %s111, %s125
      %p127 = scmp.eq.s32.totalorder %s24, 0
      %p128 = por %p126, %p127
      %s129 = ssub.s32 %s25, %s44
      %s130 = ssub.s32 %s26, %s40
      %s131 = sor.u32 %s129, %s130
      %p132 = scmp.eq.s32.totalorder %s131, 0
      %s134 = sadd.s32 %s133, 1
      %s135 = scalar_select %p132, %s133, %s134
      %p138 = pneg %p132
      %p139 = scmp.eq.s32.totalorder %s18, 7
      %p140 = por %p138, %p139
      %p141 = scmp.ne.s32.totalorder %s133, %s136
      %p142 = scmp.eq.s32.totalorder %s18, 0
      %p143 = por %p141, %p142
      %p144 = scmp.ne.s32.totalorder %s133, %s136
      %p145 = scmp.eq.s32.totalorder %s23, 7
      %p146 = por %p144, %p145
      %p147 = scmp.ne.s32.totalorder %s136, %s137
      %p148 = scmp.eq.s32.totalorder %s23, 0
      %p149 = por %p147, %p148
      %p150 = scmp.ne.s32.totalorder %s136, %s137
      %p151 = scmp.eq.s32.totalorder %s24, 7
      %p152 = por %p150, %p151
      %p154 = scmp.ne.s32.totalorder %s137, %s153
      %p155 = scmp.eq.s32.totalorder %s24, 0
      %p156 = por %p154, %p155
      %s157 = ssub.s32 %s25, %s44
      %s158 = ssub.s32 %s26, %s40
      %s159 = sor.u32 %s157, %s158
      %p160 = scmp.eq.s32.totalorder %s159, 0
      %s162 = sadd.s32 %s161, 1
      %s163 = scalar_select %p160, %s161, %s162
      %p166 = pneg %p160
      %p167 = scmp.eq.s32.totalorder %s18, 7
      %p168 = por %p166, %p167
      %p169 = scmp.ne.s32.totalorder %s161, %s164
      %p170 = scmp.eq.s32.totalorder %s18, 0
      %p171 = por %p169, %p170
      %p172 = scmp.ne.s32.totalorder %s161, %s164
      %p173 = scmp.eq.s32.totalorder %s23, 7
      %p174 = por %p172, %p173
      %p175 = scmp.ne.s32.totalorder %s164, %s165
      %p176 = scmp.eq.s32.totalorder %s23, 0
      %p177 = por %p175, %p176
      %p178 = scmp.ne.s32.totalorder %s164, %s165
      %p179 = scmp.eq.s32.totalorder %s24, 7
      %p180 = por %p178, %p179
      %p182 = scmp.ne.s32.totalorder %s165, %s181
      %p183 = scmp.eq.s32.totalorder %s24, 0
      %p184 = por %p182, %p183
      %s185 = ssub.s32 %s25, %s44
      %s186 = ssub.s32 %s26, %s40
      %s187 = sor.u32 %s185, %s186
      %p188 = scmp.eq.s32.totalorder %s187, 0
      %s190 = sadd.s32 %s189, 1
      %s191 = scalar_select %p188, %s189, %s190
      %p194 = pneg %p188
      %p195 = scmp.eq.s32.totalorder %s18, 7
      %p196 = por %p194, %p195
      %p197 = scmp.ne.s32.totalorder %s189, %s192
      %p198 = scmp.eq.s32.totalorder %s18, 0
      %p199 = por %p197, %p198
      %p200 = scmp.ne.s32.totalorder %s189, %s192
      %p201 = scmp.eq.s32.totalorder %s23, 7
      %p202 = por %p200, %p201
      %p203 = scmp.ne.s32.totalorder %s192, %s193
      %p204 = scmp.eq.s32.totalorder %s23, 0
      %p205 = por %p203, %p204
      %p206 = scmp.ne.s32.totalorder %s192, %s193
      %p207 = scmp.eq.s32.totalorder %s24, 7
      %p208 = por %p206, %p207
      %p210 = scmp.ne.s32.totalorder %s193, %s209
      %p211 = scmp.eq.s32.totalorder %s24, 0
      %p212 = por %p210, %p211
      %s213 = ssub.s32 %s25, %s44
      %s214 = ssub.s32 %s27, %s36
      %s215 = sor.u32 %s213, %s214
      %s216 = ssub.s32 %s26, %s40
      %s217 = sor.u32 %s215, %s216
      %p218 = scmp.eq.s32.totalorder %s217, 0
      %s220 = sadd.s32 %s219, 1
      %s221 = scalar_select %p218, %s219, %s220
      %p224 = pneg %p218
      %p225 = scmp.eq.s32.totalorder %s18, 7
      %p226 = por %p224, %p225
      %p227 = scmp.ne.s32.totalorder %s219, %s222
      %p228 = scmp.eq.s32.totalorder %s18, 0
      %p229 = por %p227, %p228
      %p230 = scmp.ne.s32.totalorder %s219, %s222
      %p231 = scmp.eq.s32.totalorder %s23, 7
      %p232 = por %p230, %p231
      %p233 = scmp.ne.s32.totalorder %s222, %s223
      %p234 = scmp.eq.s32.totalorder %s23, 0
      %p235 = por %p233, %p234
      %p236 = scmp.ne.s32.totalorder %s222, %s223
      %p237 = scmp.eq.s32.totalorder %s24, 7
      %p238 = por %p236, %p237
      %p240 = scmp.ne.s32.totalorder %s223, %s239
      %p241 = scmp.eq.s32.totalorder %s24, 0
      %p242 = por %p240, %p241
      %p243 = scmp.le.s32.totalorder 1, %s18
      %p244 = scmp.lt.s32.totalorder %s18, 9
      %p245 = pnand %p243, %p244
      %p246 = pneg %p245
      // Predicated region
      $region9: #{tpu_custom_call.1} parent=5 // pred_check
        _
      $region10: #{tpu_custom_call.1} parent=5 // pred_check_branch
        %248 = sbr.rel (%p245) target = $region12
      $region11: #{tpu_custom_call.1} parent=5 // pred_region
        %s249 = ssub.s32 %s18, 1
        // Predicated region
        $region13: #{tpu_custom_call.1} parent=11 // pred_check
          %p250 = pneg %p58
        $region14: #{tpu_custom_call.1} parent=11 // pred_check_branch
          %252 = sbr.rel (%p250) target = $region16
        $region15: #{tpu_custom_call.1} parent=11 // pred_region
          %s254 = ssub.s32 16, 16
          %255 = vsyncadd [#allocation5], %s254
          %s257 = sshll.u32 %s0, 4
          %s258 = int_to_ptr.vmem [resolvable:$true] %s257
          %260 = dma.vmem_to_smem %s258, 16, [#allocation3], [#allocation5]
        $region16: #{tpu_custom_call.1} parent=11 // pred_fallthru
          _
        // Predicated region
        $region17: #{tpu_custom_call.1} parent=11 // pred_check
          %p261 = pneg %p79
        $region18: #{tpu_custom_call.1} parent=11 // pred_check_branch
          %263 = sbr.rel (%p261) target = $region20
        $region19: #{tpu_custom_call.1} parent=11 // pred_region
          %s265 = ssub.s32 16, 16
          %266 = vsyncadd [#allocation7], %s265
          %s268 = sshll.u32 %s1, 4
          %s269 = int_to_ptr.vmem [resolvable:$true] %s268
          %271 = dma.vmem_to_smem %s269, 16, [#allocation6], [#allocation7]
        $region20: #{tpu_custom_call.1} parent=11 // pred_fallthru
          _
        // Predicated region
        $region21: #{tpu_custom_call.1} parent=11 // pred_check
          %p272 = pneg %p100
        $region22: #{tpu_custom_call.1} parent=11 // pred_check_branch
          %274 = sbr.rel (%p272) target = $region24
        $region23: #{tpu_custom_call.1} parent=11 // pred_region
          %s276 = ssub.s32 16, 16
          %277 = vsyncadd [#allocation7], %s276
          %s279 = sshll.u32 %s2, 4
          %s280 = int_to_ptr.vmem [resolvable:$true] %s279
          %282 = dma.vmem_to_smem %s280, 16, [#allocation8], [#allocation7]
        $region24: #{tpu_custom_call.1} parent=11 // pred_fallthru
          _
        // Predicated region
        $region25: #{tpu_custom_call.1} parent=11 // pred_check
          %p283 = pneg %p121
        $region26: #{tpu_custom_call.1} parent=11 // pred_check_branch
          %285 = sbr.rel (%p283) target = $region28
        $region27: #{tpu_custom_call.1} parent=11 // pred_region
          _
        $region28: #{tpu_custom_call.1} parent=11 // pred_fallthru
          _
      $region12: #{tpu_custom_call.1} parent=5 // pred_fallthru
        _
      %p286 = scmp.lt.s32.totalorder %s18, 8
      // Predicated region
      $region29: #{tpu_custom_call.1} parent=5 // pred_check
        %p287 = pneg %p286
      $region30: #{tpu_custom_call.1} parent=5 // pred_check_branch
        %289 = sbr.rel (%p287) target = $region32
      $region31: #{tpu_custom_call.1} parent=5 // pred_region
        // Predicated region
        $region33: #{tpu_custom_call.1} parent=31 // pred_check
          %p290 = pneg %p143
        $region34: #{tpu_custom_call.1} parent=31 // pred_check_branch
          %292 = sbr.rel (%p290) target = $region36
        $region35: #{tpu_custom_call.1} parent=31 // pred_region
          %p293 = scmp.lt.s32.totalorder %s25, 1
          %s294 = scalar_select %p293, %s25, 1
          %p295 = scmp.lt.s32.totalorder %s26, 0
          %s296 = scalar_select %p295, %s26, 0
          %s297 = sadd.s32 %s296, %s294
          %s298 = smul.addr %s297, 4
          %s299 = scalar_lea.vmem %s4, %s298
        $region36: #{tpu_custom_call.1} parent=31 // pred_fallthru
          _
        // Predicated region
        $region37: #{tpu_custom_call.1} parent=31 // pred_check
          %p300 = pneg %p171
        $region38: #{tpu_custom_call.1} parent=31 // pred_check_branch
          %302 = sbr.rel (%p300) target = $region40
        $region39: #{tpu_custom_call.1} parent=31 // pred_region
          %p303 = scmp.lt.s32.totalorder %s25, 1
          %s304 = scalar_select %p303, %s25, 1
          %p305 = scmp.lt.s32.totalorder %s26, 0
          %s306 = scalar_select %p305, %s26, 0
          %s307 = sadd.s32 %s306, %s304
          %s308 = smul.addr %s307, 4
          %s309 = scalar_lea.vmem %s5, %s308
        $region40: #{tpu_custom_call.1} parent=31 // pred_fallthru
          _
        // Predicated region
        $region41: #{tpu_custom_call.1} parent=31 // pred_check
          %p310 = pneg %p199
        $region42: #{tpu_custom_call.1} parent=31 // pred_check_branch
          %312 = sbr.rel (%p310) target = $region44
        $region43: #{tpu_custom_call.1} parent=31 // pred_region
          %p313 = scmp.lt.s32.totalorder %s25, 1
          %s314 = scalar_select %p313, %s25, 1
          %p315 = scmp.lt.s32.totalorder %s26, 0
          %s316 = scalar_select %p315, %s26, 0
          %s317 = sadd.s32 %s316, %s314
          %s318 = smul.addr %s317, 4
          %s319 = scalar_lea.vmem %s6, %s318
        $region44: #{tpu_custom_call.1} parent=31 // pred_fallthru
          _
      $region32: #{tpu_custom_call.1} parent=5 // pred_fallthru
        _
      %p320 = scmp.le.s32.totalorder 1, %s18
      %p321 = scmp.lt.s32.totalorder %s18, 9
      %p322 = pnand %p320, %p321
      %p323 = pneg %p322
      // Predicated region
      $region45: #{tpu_custom_call.1} parent=5 // pred_check
        _
      $region46: #{tpu_custom_call.1} parent=5 // pred_check_branch
        %325 = sbr.rel (%p322) target = $region48
      $region47: #{tpu_custom_call.1} parent=5 // pred_region
        %s326 = ssub.s32 %s18, 1
        // Predicated region
        $region49: #{tpu_custom_call.1} parent=47 // pred_check
          %p327 = pneg %p58
        $region50: #{tpu_custom_call.1} parent=47 // pred_check_branch
          %329 = sbr.rel (%p327) target = $region52
        $region51: #{tpu_custom_call.1} parent=47 // pred_region
          %330 = dma.done [#allocation5], 16
        $region52: #{tpu_custom_call.1} parent=47 // pred_fallthru
          _
        // Predicated region
        $region53: #{tpu_custom_call.1} parent=47 // pred_check
          %p331 = pneg %p79
        $region54: #{tpu_custom_call.1} parent=47 // pred_check_branch
          %333 = sbr.rel (%p331) target = $region56
        $region55: #{tpu_custom_call.1} parent=47 // pred_region
          %334 = dma.done [#allocation7], 16
        $region56: #{tpu_custom_call.1} parent=47 // pred_fallthru
          _
        // Predicated region
        $region57: #{tpu_custom_call.1} parent=47 // pred_check
          %p335 = pneg %p100
        $region58: #{tpu_custom_call.1} parent=47 // pred_check_branch
          %337 = sbr.rel (%p335) target = $region60
        $region59: #{tpu_custom_call.1} parent=47 // pred_region
          %338 = dma.done [#allocation7], 16
        $region60: #{tpu_custom_call.1} parent=47 // pred_fallthru
          _
        %339 = sfence
        %p340 = pneg %p58
        %p341 = pneg %p55
        %p342 = pneg %p79
        %p343 = pneg %p76
        %p344 = pneg %p100
        %p345 = pneg %p97
        %p346 = pneg %p121
        %p347 = pneg %p118
        %p348 = scmp.lt.s32.totalorder %s28, 1
        %s349 = scalar_select %p348, %s28, 1
        %p350 = scmp.lt.s32.totalorder %s29, 0
        %s351 = scalar_select %p350, %s29, 0
        %s352 = sadd.s32 %s351, %s349
        %s353 = smul.addr %s352, 4
        %s354 = scalar_lea.vmem %s4, %s353
        %p355 = pneg %p149
        %p356 = pneg %p146
        %p357 = scmp.lt.s32.totalorder %s28, 1
        %s358 = scalar_select %p357, %s28, 1
        %p359 = scmp.lt.s32.totalorder %s29, 0
        %s360 = scalar_select %p359, %s29, 0
        %s361 = sadd.s32 %s360, %s358
        %s362 = smul.addr %s361, 4
        %s363 = scalar_lea.vmem %s5, %s362
        %p364 = pneg %p177
        %p365 = pneg %p174
        %p366 = scmp.lt.s32.totalorder %s28, 1
        %s367 = scalar_select %p366, %s28, 1
        %p368 = scmp.lt.s32.totalorder %s29, 0
        %s369 = scalar_select %p368, %s29, 0
        %s370 = sadd.s32 %s369, %s367
        %s371 = smul.addr %s370, 4
        %s372 = scalar_lea.vmem %s6, %s371
        %p373 = pneg %p205
        %p374 = pneg %p202
        %p375 = pneg %p235
        %p376 = pneg %p232
        %s377 = sand.u32 %s222, 1
        %s378 = scalar_lea.sflag [#allocation4], %s377
        %s379 = sand.u32 %s222, 1
        %s380 = smul.addr %s379, 48
        %s381 = scalar_lea.vmem [#allocation9], %s380
        %p382 = scmp.lt.s32.totalorder %s28, 1
        %s383 = scalar_select %p382, %s28, 1
        %p384 = scmp.lt.s32.totalorder %s29, 0
        %s385 = scalar_select %p384, %s29, 0
        %s386 = sadd.s32 %s385, %s383
        %s387 = smul.addr %s386, 4
        %s388 = scalar_lea.vmem %s4, %s387
        %p389 = scmp.lt.s32.totalorder %s28, 1
        %s390 = scalar_select %p389, %s28, 1
        %p391 = scmp.lt.s32.totalorder %s29, 0
        %s392 = scalar_select %p391, %s29, 0
        %s393 = sadd.s32 %s392, %s390
        %s394 = smul.addr %s393, 4
        %s395 = scalar_lea.vmem %s5, %s394
        %p396 = scmp.lt.s32.totalorder %s28, 1
        %s397 = scalar_select %p396, %s28, 1
        %p398 = scmp.lt.s32.totalorder %s29, 0
        %s399 = scalar_select %p398, %s29, 0
        %s400 = sadd.s32 %s399, %s397
        %s401 = smul.addr %s400, 4
        %s402 = scalar_lea.vmem %s6, %s401
        %p403 = scmp.eq.s32.totalorder %s30, 0
        // Predicated region
        $region61: #{tpu_custom_call.1} parent=47 // pred_check
          %p404 = pneg %p403
        $region62: #{tpu_custom_call.1} parent=47 // pred_check_branch
          %406 = sbr.rel (%p404) target = $region64
        $region63: #{tpu_custom_call.1} parent=47 // pred_region
          %v407 = vld [vmem:[%s3] sm:$0xff]
          %v408 = vld [vmem:[%s3 + $0x8] sm:$0xff]
          %v409 = vld [vmem:[%s395] sm:$0x7]
          %v410 = vld [vmem:[%s402] sm:$0x7]
          %v413 = vunpack.c.l.s4 1966171168
          %v414 = vunpack.c.0.s8 %v413
          %v415 = vlaneseq
          %v416 = vshrl.u32 %v415, 7
          %v417 = vsub.s32 %v414, %v416
          %v418 = vrot.slane %v410, %v417
          %v419 = vcombine.high %v418, %v418
          %v421 = vunpack.c.l.s4 1966171168
          %v422 = vunpack.c.0.s8 %v421
          %v423 = vlaneseq
          %v424 = vshrl.u32 %v423, 7
          %v425 = vsub.s32 %v422, %v424
          %v426 = vrot.slane %v418, %v425
          %v428 = vunpack.c.l.s4 1966171168
          %v429 = vunpack.c.0.s8 %v428
          %v430 = vlaneseq
          %v431 = vshrl.u32 %v430, 7
          %v432 = vsub.s32 %v429, %v431
          %v433 = vrot.slane %v419, %v432
          %v434 = vcombine.high %v426, %v426
          %v437 = vunpack.c.l.s4 1966171168
          %v438 = vunpack.c.0.s8 %v437
          %v439 = vlaneseq
          %v440 = vshrl.u32 %v439, 7
          %v441 = vsub.s32 %v438, %v440
          %v442 = vrot.slane %v409, %v441
          %v443 = vcombine.high %v442, %v442
          %v445 = vunpack.c.l.s4 1966171168
          %v446 = vunpack.c.0.s8 %v445
          %v447 = vlaneseq
          %v448 = vshrl.u32 %v447, 7
          %v449 = vsub.s32 %v446, %v448
          %v450 = vrot.slane %v442, %v449
          %v452 = vunpack.c.l.s4 1966171168
          %v453 = vunpack.c.0.s8 %v452
          %v454 = vlaneseq
          %v455 = vshrl.u32 %v454, 7
          %v456 = vsub.s32 %v453, %v455
          %v457 = vrot.slane %v443, %v456
          %v458 = vcombine.high %v450, %v450
          %460 = vset.pattern.permute.xlu0 0
          %461 = vperm.xlu0 %460, %v407
          %v462 = vpop.permute.xlu0 %461
          %465 = vset.pattern.permute.xlu0 0
          %466 = vperm.xlu0 %465, %v408
          %v467 = vpop.permute.xlu0 %466
          %v469 = vlaneseq
          %v470 = vshrl.u32 %v469, 7
          %v471 = vsub.s32 0, %v470
          %v472 = vrot.slane %v450, %v471
          %v473 = vlaneseq
          %v474 = vshrl.u32 %v473, 7
          %v475 = vsub.s32 0, %v474
          %v476 = vrot.slane %v457, %v475
          %v477 = vlaneseq
          %v478 = vshrl.u32 %v477, 7
          %v479 = vsub.s32 0, %v478
          %v480 = vrot.slane %v458, %v479
          %v484 = vsub.f32 %v462, %v472
          %v485 = vsub.f32 %v467, %v472
          %v486 = vsub.f32 %v462, %v476
          %v487 = vsub.f32 %v467, %v476
          %v488 = vsub.f32 %v462, %v480
          %v489 = vsub.f32 %v467, %v480
          %v490 = vlaneseq
          %v491 = vshrl.u32 %v490, 7
          %v492 = vsub.s32 0, %v491
          %v493 = vrot.slane %v426, %v492
          %v494 = vlaneseq
          %v495 = vshrl.u32 %v494, 7
          %v496 = vsub.s32 0, %v495
          %v497 = vrot.slane %v433, %v496
          %v498 = vlaneseq
          %v499 = vshrl.u32 %v498, 7
          %v500 = vsub.s32 0, %v499
          %v501 = vrot.slane %v434, %v500
          %v505 = vmul.f32 %v493, %v484
          %v506 = vmul.f32 %v493, %v485
          %v507 = vmul.f32 %v497, %v486
          %v508 = vmul.f32 %v497, %v487
          %v509 = vmul.f32 %v501, %v488
          %v510 = vmul.f32 %v501, %v489
          %511 = vst [vmem:[#allocation2] sm:$0xff] %v505
          %512 = vst [vmem:[#allocation2 + $0x8] sm:$0xff] %v506
          %513 = vst [vmem:[#allocation2 + $0x10] sm:$0xff] %v507
          %514 = vst [vmem:[#allocation2 + $0x18] sm:$0xff] %v508
          %515 = vst [vmem:[#allocation2 + $0x20] sm:$0xff] %v509
          %516 = vst [vmem:[#allocation2 + $0x28] sm:$0xff] %v510
        $region64: #{tpu_custom_call.1} parent=47 // pred_fallthru
          _
        %s517 = smul.u32 %s30, 15
        %s518 = smul.u32 %s30, 18
        %v519 = vld [vmem:[#allocation2] sm:$0xff]
        %v520 = vld [vmem:[#allocation2 + $0x8] sm:$0xff]
        %s521 = sadd.s32 %s518, 15
        %s522 = sld [smem:[#allocation6 + %s521]]
        %v523 = vstv %s522
        %s524 = sld [smem:[#allocation8]]
        %v525 = vstv %s524
        %v526 = vsub.f32 %v519, %v525
        %v527 = vsub.f32 %v520, %v525
        %s528 = sld [smem:[#allocation6 + %s518]]
        %v529 = vmul.f32 %v526, %v526
        %v530 = vmul.f32 %v527, %v527
        %s531 = sld [smem:[#allocation3 + %s517]]
        %v532 = vstv %s531
        %v533 = vmul.f32 %v529, %v532
        %v534 = vmul.f32 %v530, %v532
        %v535 = vmul.f32 %v533, 1.442695
        %v536 = vpow.pop %v535
        %v537 = vmul.f32 %v534, 1.442695
        %v538 = vpow.pop %v537
        %v539 = vstv %s528
        %v540 = vmul.f32 %v539, %v536
        %v541 = vmul.f32 %v539, %v538
        %v542 = vadd.f32 %v523, %v540
        %v543 = vadd.f32 %v523, %v541
        %s544 = sld [smem:[#allocation8 + $0x1]]
        %v545 = vstv %s544
        %v546 = vsub.f32 %v519, %v545
        %v547 = vsub.f32 %v520, %v545
        %s548 = sadd.s32 %s518, 3
        %s549 = sld [smem:[#allocation6 + %s548]]
        %v550 = vmul.f32 %v546, %v546
        %v551 = vmul.f32 %v547, %v547
        %s552 = sadd.s32 %s517, 3
        %s553 = sld [smem:[#allocation3 + %s552]]
        %v554 = vstv %s553
        %v555 = vmul.f32 %v550, %v554
        %v556 = vmul.f32 %v551, %v554
        %v557 = vmul.f32 %v555, 1.442695
        %v558 = vpow.pop %v557
        %v559 = vmul.f32 %v556, 1.442695
        %v560 = vpow.pop %v559
        %v561 = vstv %s549
        %v562 = vmul.f32 %v561, %v558
        %v563 = vmul.f32 %v561, %v560
        %v564 = vadd.f32 %v542, %v562
        %v565 = vadd.f32 %v543, %v563
        %s566 = sld [smem:[#allocation8 + $0x2]]
        %v567 = vstv %s566
        %v568 = vsub.f32 %v519, %v567
        %v569 = vsub.f32 %v520, %v567
        %s570 = sadd.s32 %s518, 6
        %s571 = sld [smem:[#allocation6 + %s570]]
        %v572 = vmul.f32 %v568, %v568
        %v573 = vmul.f32 %v569, %v569
        %s574 = sadd.s32 %s517, 6
        %s575 = sld [smem:[#allocation3 + %s574]]
        %v576 = vstv %s575
        %v577 = vmul.f32 %v572, %v576
        %v578 = vmul.f32 %v573, %v576
        %v579 = vmul.f32 %v577, 1.442695
        %v580 = vpow.pop %v579
        %v581 = vmul.f32 %v578, 1.442695
        %v582 = vpow.pop %v581
        %v583 = vstv %s571
        %v584 = vmul.f32 %v583, %v580
        %v585 = vmul.f32 %v583, %v582
        %v586 = vadd.f32 %v564, %v584
        %v587 = vadd.f32 %v565, %v585
        %s588 = sld [smem:[#allocation8 + $0x3]]
        %v589 = vstv %s588
        %v590 = vsub.f32 %v519, %v589
        %v591 = vsub.f32 %v520, %v589
        %s592 = sadd.s32 %s518, 9
        %s593 = sld [smem:[#allocation6 + %s592]]
        %v594 = vmul.f32 %v590, %v590
        %v595 = vmul.f32 %v591, %v591
        %s596 = sadd.s32 %s517, 9
        %s597 = sld [smem:[#allocation3 + %s596]]
        %v598 = vstv %s597
        %v599 = vmul.f32 %v594, %v598
        %v600 = vmul.f32 %v595, %v598
        %v601 = vmul.f32 %v599, 1.442695
        %v602 = vpow.pop %v601
        %v603 = vmul.f32 %v600, 1.442695
        %v604 = vpow.pop %v603
        %v605 = vstv %s593
        %v606 = vmul.f32 %v605, %v602
        %v607 = vmul.f32 %v605, %v604
        %v608 = vadd.f32 %v586, %v606
        %v609 = vadd.f32 %v587, %v607
        %s610 = sld [smem:[#allocation8 + $0x4]]
        %v611 = vstv %s610
        %v612 = vsub.f32 %v519, %v611
        %v613 = vsub.f32 %v520, %v611
        %s614 = sadd.s32 %s518, 12
        %s615 = sld [smem:[#allocation6 + %s614]]
        %v616 = vmul.f32 %v612, %v612
        %v617 = vmul.f32 %v613, %v613
        %s618 = sadd.s32 %s517, 12
        %s619 = sld [smem:[#allocation3 + %s618]]
        %v620 = vstv %s619
        %v621 = vmul.f32 %v616, %v620
        %v622 = vmul.f32 %v617, %v620
        %v623 = vmul.f32 %v621, 1.442695
        %v624 = vpow.pop %v623
        %v625 = vmul.f32 %v622, 1.442695
        %v626 = vpow.pop %v625
        %v627 = vstv %s615
        %v628 = vmul.f32 %v627, %v624
        %v629 = vmul.f32 %v627, %v626
        %v630 = vadd.f32 %v608, %v628
        %v631 = vadd.f32 %v609, %v629
        %v632 = vld [vmem:[%s388] sm:$0x1]
        %v633 = vlaneseq
        %v634 = vshrl.u32 %v633, 7
        %v635 = vsub.s32 0, %v634
        %v636 = vrot.slane %v632, %v635
        %v637 = vmul.f32 %v636, %v630
        %v638 = vmul.f32 %v636, %v631
        %639 = vst [vmem:[%s381] sm:$0xff] %v637
        %640 = vst [vmem:[%s381 + $0x8] sm:$0xff] %v638
        %s641 = scalar_lea.vmem [#allocation2], 16
        %v642 = vld [vmem:[%s641] sm:$0xff]
        %v643 = vld [vmem:[%s641 + $0x8] sm:$0xff]
        %s644 = sadd.s32 %s518, 16
        %s645 = sld [smem:[#allocation6 + %s644]]
        %v646 = vstv %s645
        %s647 = sld [smem:[#allocation8]]
        %v648 = vstv %s647
        %v649 = vsub.f32 %v642, %v648
        %v650 = vsub.f32 %v643, %v648
        %s651 = sadd.s32 %s518, 1
        %s652 = sld [smem:[#allocation6 + %s651]]
        %v653 = vmul.f32 %v649, %v649
        %v654 = vmul.f32 %v650, %v650
        %s655 = sadd.s32 %s517, 1
        %s656 = sld [smem:[#allocation3 + %s655]]
        %v657 = vstv %s656
        %v658 = vmul.f32 %v653, %v657
        %v659 = vmul.f32 %v654, %v657
        %v660 = vmul.f32 %v658, 1.442695
        %v661 = vpow.pop %v660
        %v662 = vmul.f32 %v659, 1.442695
        %v663 = vpow.pop %v662
        %v664 = vstv %s652
        %v665 = vmul.f32 %v664, %v661
        %v666 = vmul.f32 %v664, %v663
        %v667 = vadd.f32 %v646, %v665
        %v668 = vadd.f32 %v646, %v666
        %s669 = sld [smem:[#allocation8 + $0x1]]
        %v670 = vstv %s669
        %v671 = vsub.f32 %v642, %v670
        %v672 = vsub.f32 %v643, %v670
        %s673 = sadd.s32 %s518, 4
        %s674 = sld [smem:[#allocation6 + %s673]]
        %v675 = vmul.f32 %v671, %v671
        %v676 = vmul.f32 %v672, %v672
        %s677 = sadd.s32 %s517, 4
        %s678 = sld [smem:[#allocation3 + %s677]]
        %v679 = vstv %s678
        %v680 = vmul.f32 %v675, %v679
        %v681 = vmul.f32 %v676, %v679
        %v682 = vmul.f32 %v680, 1.442695
        %v683 = vpow.pop %v682
        %v684 = vmul.f32 %v681, 1.442695
        %v685 = vpow.pop %v684
        %v686 = vstv %s674
        %v687 = vmul.f32 %v686, %v683
        %v688 = vmul.f32 %v686, %v685
        %v689 = vadd.f32 %v667, %v687
        %v690 = vadd.f32 %v668, %v688
        %s691 = sld [smem:[#allocation8 + $0x2]]
        %v692 = vstv %s691
        %v693 = vsub.f32 %v642, %v692
        %v694 = vsub.f32 %v643, %v692
        %s695 = sadd.s32 %s518, 7
        %s696 = sld [smem:[#allocation6 + %s695]]
        %v697 = vmul.f32 %v693, %v693
        %v698 = vmul.f32 %v694, %v694
        %s699 = sadd.s32 %s517, 7
        %s700 = sld [smem:[#allocation3 + %s699]]
        %v701 = vstv %s700
        %v702 = vmul.f32 %v697, %v701
        %v703 = vmul.f32 %v698, %v701
        %v704 = vmul.f32 %v702, 1.442695
        %v705 = vpow.pop %v704
        %v706 = vmul.f32 %v703, 1.442695
        %v707 = vpow.pop %v706
        %v708 = vstv %s696
        %v709 = vmul.f32 %v708, %v705
        %v710 = vmul.f32 %v708, %v707
        %v711 = vadd.f32 %v689, %v709
        %v712 = vadd.f32 %v690, %v710
        %s713 = sld [smem:[#allocation8 + $0x3]]
        %v714 = vstv %s713
        %v715 = vsub.f32 %v642, %v714
        %v716 = vsub.f32 %v643, %v714
        %s717 = sadd.s32 %s518, 10
        %s718 = sld [smem:[#allocation6 + %s717]]
        %v719 = vmul.f32 %v715, %v715
        %v720 = vmul.f32 %v716, %v716
        %s721 = sadd.s32 %s517, 10
        %s722 = sld [smem:[#allocation3 + %s721]]
        %v723 = vstv %s722
        %v724 = vmul.f32 %v719, %v723
        %v725 = vmul.f32 %v720, %v723
        %v726 = vmul.f32 %v724, 1.442695
        %v727 = vpow.pop %v726
        %v728 = vmul.f32 %v725, 1.442695
        %v729 = vpow.pop %v728
        %v730 = vstv %s718
        %v731 = vmul.f32 %v730, %v727
        %v732 = vmul.f32 %v730, %v729
        %v733 = vadd.f32 %v711, %v731
        %v734 = vadd.f32 %v712, %v732
        %s735 = sld [smem:[#allocation8 + $0x4]]
        %v736 = vstv %s735
        %v737 = vsub.f32 %v642, %v736
        %v738 = vsub.f32 %v643, %v736
        %s739 = sadd.s32 %s518, 13
        %s740 = sld [smem:[#allocation6 + %s739]]
        %v741 = vmul.f32 %v737, %v737
        %v742 = vmul.f32 %v738, %v738
        %s743 = sadd.s32 %s517, 13
        %s744 = sld [smem:[#allocation3 + %s743]]
        %v745 = vstv %s744
        %v746 = vmul.f32 %v741, %v745
        %v747 = vmul.f32 %v742, %v745
        %v748 = vmul.f32 %v746, 1.442695
        %v749 = vpow.pop %v748
        %v750 = vmul.f32 %v747, 1.442695
        %v751 = vpow.pop %v750
        %v752 = vstv %s740
        %v753 = vmul.f32 %v752, %v749
        %v754 = vmul.f32 %v752, %v751
        %v755 = vadd.f32 %v733, %v753
        %v756 = vadd.f32 %v734, %v754
        %v757 = vld [vmem:[%s388 + $0x1] sm:$0x1]
        %v758 = vlaneseq
        %v759 = vshrl.u32 %v758, 7
        %v760 = vsub.s32 0, %v759
        %v761 = vrot.slane %v757, %v760
        %v762 = vmul.f32 %v761, %v755
        %v763 = vmul.f32 %v761, %v756
        %s764 = scalar_lea.vmem %s381, 16 [#allocation9]
        %765 = vst [vmem:[%s764] sm:$0xff] %v762
        %766 = vst [vmem:[%s764 + $0x8] sm:$0xff] %v763
        %s767 = scalar_lea.vmem [#allocation2], 32
        %v768 = vld [vmem:[%s767] sm:$0xff]
        %v769 = vld [vmem:[%s767 + $0x8] sm:$0xff]
        %s770 = sadd.s32 %s518, 17
        %s771 = sld [smem:[#allocation6 + %s770]]
        %v772 = vstv %s771
        %s773 = sld [smem:[#allocation8]]
        %v774 = vstv %s773
        %v775 = vsub.f32 %v768, %v774
        %v776 = vsub.f32 %v769, %v774
        %s777 = sadd.s32 %s518, 2
        %s778 = sld [smem:[#allocation6 + %s777]]
        %v779 = vmul.f32 %v775, %v775
        %v780 = vmul.f32 %v776, %v776
        %s781 = sadd.s32 %s517, 2
        %s782 = sld [smem:[#allocation3 + %s781]]
        %v783 = vstv %s782
        %v784 = vmul.f32 %v779, %v783
        %v785 = vmul.f32 %v780, %v783
        %v786 = vmul.f32 %v784, 1.442695
        %v787 = vpow.pop %v786
        %v788 = vmul.f32 %v785, 1.442695
        %v789 = vpow.pop %v788
        %v790 = vstv %s778
        %v791 = vmul.f32 %v790, %v787
        %v792 = vmul.f32 %v790, %v789
        %v793 = vadd.f32 %v772, %v791
        %v794 = vadd.f32 %v772, %v792
        %s795 = sld [smem:[#allocation8 + $0x1]]
        %v796 = vstv %s795
        %v797 = vsub.f32 %v768, %v796
        %v798 = vsub.f32 %v769, %v796
        %s799 = sadd.s32 %s518, 5
        %s800 = sld [smem:[#allocation6 + %s799]]
        %v801 = vmul.f32 %v797, %v797
        %v802 = vmul.f32 %v798, %v798
        %s803 = sadd.s32 %s517, 5
        %s804 = sld [smem:[#allocation3 + %s803]]
        %v805 = vstv %s804
        %v806 = vmul.f32 %v801, %v805
        %v807 = vmul.f32 %v802, %v805
        %v808 = vmul.f32 %v806, 1.442695
        %v809 = vpow.pop %v808
        %v810 = vmul.f32 %v807, 1.442695
        %v811 = vpow.pop %v810
        %v812 = vstv %s800
        %v813 = vmul.f32 %v812, %v809
        %v814 = vmul.f32 %v812, %v811
        %v815 = vadd.f32 %v793, %v813
        %v816 = vadd.f32 %v794, %v814
        %s817 = sld [smem:[#allocation8 + $0x2]]
        %v818 = vstv %s817
        %v819 = vsub.f32 %v768, %v818
        %v820 = vsub.f32 %v769, %v818
        %s821 = sadd.s32 %s518, 8
        %s822 = sld [smem:[#allocation6 + %s821]]
        %v823 = vmul.f32 %v819, %v819
        %v824 = vmul.f32 %v820, %v820
        %s825 = sadd.s32 %s517, 8
        %s826 = sld [smem:[#allocation3 + %s825]]
        %v827 = vstv %s826
        %v828 = vmul.f32 %v823, %v827
        %v829 = vmul.f32 %v824, %v827
        %v830 = vmul.f32 %v828, 1.442695
        %v831 = vpow.pop %v830
        %v832 = vmul.f32 %v829, 1.442695
        %v833 = vpow.pop %v832
        %v834 = vstv %s822
        %v835 = vmul.f32 %v834, %v831
        %v836 = vmul.f32 %v834, %v833
        %v837 = vadd.f32 %v815, %v835
        %v838 = vadd.f32 %v816, %v836
        %s839 = sld [smem:[#allocation8 + $0x3]]
        %v840 = vstv %s839
        %v841 = vsub.f32 %v768, %v840
        %v842 = vsub.f32 %v769, %v840
        %s843 = sadd.s32 %s518, 11
        %s844 = sld [smem:[#allocation6 + %s843]]
        %v845 = vmul.f32 %v841, %v841
        %v846 = vmul.f32 %v842, %v842
        %s847 = sadd.s32 %s517, 11
        %s848 = sld [smem:[#allocation3 + %s847]]
        %v849 = vstv %s848
        %v850 = vmul.f32 %v845, %v849
        %v851 = vmul.f32 %v846, %v849
        %v852 = vmul.f32 %v850, 1.442695
        %v853 = vpow.pop %v852
        %v854 = vmul.f32 %v851, 1.442695
        %v855 = vpow.pop %v854
        %v856 = vstv %s844
        %v857 = vmul.f32 %v856, %v853
        %v858 = vmul.f32 %v856, %v855
        %v859 = vadd.f32 %v837, %v857
        %v860 = vadd.f32 %v838, %v858
        %s861 = sld [smem:[#allocation8 + $0x4]]
        %v862 = vstv %s861
        %v863 = vsub.f32 %v768, %v862
        %v864 = vsub.f32 %v769, %v862
        %s865 = sadd.s32 %s518, 14
        %s866 = sld [smem:[#allocation6 + %s865]]
        %v867 = vmul.f32 %v863, %v863
        %v868 = vmul.f32 %v864, %v864
        %s869 = sadd.s32 %s517, 14
        %s870 = sld [smem:[#allocation3 + %s869]]
        %v871 = vstv %s870
        %v872 = vmul.f32 %v867, %v871
        %v873 = vmul.f32 %v868, %v871
        %v874 = vmul.f32 %v872, 1.442695
        %v875 = vpow.pop %v874
        %v876 = vmul.f32 %v873, 1.442695
        %v877 = vpow.pop %v876
        %v878 = vstv %s866
        %v879 = vmul.f32 %v878, %v875
        %v880 = vmul.f32 %v878, %v877
        %v881 = vadd.f32 %v859, %v879
        %v882 = vadd.f32 %v860, %v880
        %v883 = vld [vmem:[%s388 + $0x2] sm:$0x1]
        %v884 = vlaneseq
        %v885 = vshrl.u32 %v884, 7
        %v886 = vsub.s32 0, %v885
        %v887 = vrot.slane %v883, %v886
        %v888 = vmul.f32 %v887, %v881
        %v889 = vmul.f32 %v887, %v882
        %s890 = scalar_lea.vmem %s381, 32 [#allocation9]
        %891 = vst [vmem:[%s890] sm:$0xff] %v888
        %892 = vst [vmem:[%s890 + $0x8] sm:$0xff] %v889
        %s893 = sand.u32 %s222, 1
        %s894 = scalar_lea.sflag [#allocation4], %s893
        %s895 = sand.u32 %s222, 1
        %s896 = smul.addr %s895, 48
        %s897 = scalar_lea.vmem [#allocation9], %s896
        // Predicated region
        $region65: #{tpu_custom_call.1} parent=47 // pred_check
          %p898 = pneg %p232
        $region66: #{tpu_custom_call.1} parent=47 // pred_check_branch
          %900 = sbr.rel (%p898) target = $region68
        $region67: #{tpu_custom_call.1} parent=47 // pred_region
          %s902 = ssub.s32 768, 768
          %903 = vsyncadd %s894, %s902
          %s904 = smul.addr %s30, 6
          %s905 = sadd.s32 %s29, %s904
          %s906 = smul.addr %s28, 24
          %s907 = sadd.s32 %s905, %s906
          %s908 = smul.addr %s907, 128
          %s909 = scalar_lea.hbm %s7, %s908
          %s910 = sshll.u32 %s897, 4
          %s911 = int_to_ptr.vmem [resolvable:$true] %s910
          %916 = dma.vmem_to_hbm [thread:$0]  %s911, 768, %s909, %s894, 128, 128, 8
        $region68: #{tpu_custom_call.1} parent=47 // pred_fallthru
          _
      $region48: #{tpu_custom_call.1} parent=5 // pred_fallthru
        _
      %p917 = scmp.le.s32.totalorder 2, %s18
      // Predicated region
      $region69: #{tpu_custom_call.1} parent=5 // pred_check
        %p918 = pneg %p917
      $region70: #{tpu_custom_call.1} parent=5 // pred_check_branch
        %920 = sbr.rel (%p918) target = $region72
      $region71: #{tpu_custom_call.1} parent=5 // pred_region
        %s921 = ssub.s32 %s18, 2
        // Predicated region
        $region73: #{tpu_custom_call.1} parent=71 // pred_check
          %p922 = pneg %p238
        $region74: #{tpu_custom_call.1} parent=71 // pred_check_branch
          %924 = sbr.rel (%p922) target = $region76
        $region75: #{tpu_custom_call.1} parent=71 // pred_region
          %s925 = sand.u32 %s223, 1
          %s926 = scalar_lea.sflag [#allocation4], %s925
          %s927 = sand.u32 %s223, 1
          %s928 = smul.addr %s927, 48
          %s929 = scalar_lea.vmem [#allocation9], %s928
          %930 = dma.done %s926, 768
        $region76: #{tpu_custom_call.1} parent=71 // pred_fallthru
          _
      $region72: #{tpu_custom_call.1} parent=5 // pred_fallthru
        _
    $region6: #{tpu_custom_call.1} parent=1 // loop_footer
      %s22 = sadd.s32 1, %s18
    $region7: #{tpu_custom_call.1} parent=1 // loop_footer_branch
      %17 = sbr.rel target = $region3
    $region8: #{tpu_custom_call.1} parent=1 // loop_exit
      _
    %931 = vsyncpa [#allocation4], 1
    %s932 = scalar_lea.sflag [#allocation4], 1
    %933 = vsyncpa %s932, 1
    %934 = vsyncpa [#allocation5], 1
    %s935 = scalar_lea.sflag [#allocation5], 1
    %936 = vsyncpa %s935, 1
    %937 = vsyncpa [#allocation7], 1

</llo_original>
